<compile_context>
chip_gen: v7x
topology: tpu7x:2x2x1
jax: 0.10.0
libtpu: 0.0.40
codegen_flags: <defaults>
</compile_context>

<pallas_src>
import functools

import jax
import jax.numpy as jnp
from jax.experimental import pallas as pl
from jax.experimental.pallas import tpu as pltpu


def _layernorm(x, gamma, beta, eps=1e-5):
    # PyTorch nn.LayerNorm: biased variance, eps inside the sqrt; math in f32.
    x = x.astype(jnp.float32)
    mu = jnp.mean(x, axis=-1, keepdims=True)
    var = jnp.mean((x - mu) ** 2, axis=-1, keepdims=True)
    return (x - mu) * jax.lax.rsqrt(var + eps) * gamma + beta


def encoder_layer_kernel(num_heads,
                         xq_ref, xkv_ref,
                         wq_ref, bq_ref, wk_ref, bk_ref, wv_ref, bv_ref,
                         wo_ref, bo_ref,
                         w1_ref, b1_ref, w2_ref, b2_ref,
                         g1_ref, be1_ref, g2_ref, be2_ref,
                         o_ref,
                         k_scr, v_scr):
    qi = pl.program_id(1)
    block_q, d_model = xq_ref.shape
    d_k = d_model // num_heads
    scale = 1.0 / (d_k ** 0.5)

    # --- K / V projection of the full sequence: once per batch element
    #     (query tile 0), kept head-major in VMEM scratch for later tiles.
    @pl.when(qi == 0)
    def _():
        xf = xkv_ref[...]                                        # (S, D)
        kf = jnp.dot(xf, wk_ref[...], preferred_element_type=jnp.float32) + bk_ref[...]
        vf = jnp.dot(xf, wv_ref[...], preferred_element_type=jnp.float32) + bv_ref[...]
        for h in range(num_heads):                               # data staging only
            sl = slice(h * d_k, (h + 1) * d_k)
            k_scr[h] = kf[:, sl].astype(k_scr.dtype)
            v_scr[h] = vf[:, sl].astype(v_scr.dtype)

    x = xq_ref[...]                                              # (block_q, D)
    # Q projection; 1/sqrt(d_k) folded into q (block_q x D multiply) instead
    # of scaling the (H, block_q, S) score tensor.
    q = ((jnp.dot(x, wq_ref[...], preferred_element_type=jnp.float32)
          + bq_ref[...]) * scale).astype(x.dtype)
    qh = jnp.stack([q[:, h * d_k:(h + 1) * d_k] for h in range(num_heads)],
                   axis=0)                                       # (H, block_q, d_k)

    # --- single batched-over-heads attention; contraction over d_k / S,
    #     MXU consumes K directly (no materialized transpose).
    kh = k_scr[...]                                              # (H, S, d_k)
    vh = v_scr[...]                                              # (H, S, d_k)
    s = jnp.einsum("hqd,hkd->hqk", qh, kh,
                   preferred_element_type=jnp.float32)           # (H, block_q, S)
    s = s - jnp.max(s, axis=-1, keepdims=True)
    p = jnp.exp(s)
    denom = jnp.sum(p, axis=-1, keepdims=True)
    p = p * pl.reciprocal(denom, approx=True)                    # EUP, not a VPU divide
    ctx = jnp.einsum("hqk,hkd->hqd", p.astype(vh.dtype), vh,
                     preferred_element_type=jnp.float32)         # (H, block_q, d_k)
    attn = jnp.concatenate([ctx[h] for h in range(num_heads)], axis=-1)  # (block_q, D)
    attn = jnp.dot(attn, wo_ref[...], preferred_element_type=jnp.float32) + bo_ref[...]
    # TODO(synk): dropout layers are identity (inference semantics); mask=None path only.

    # --- residual + LayerNorm 1
    x1 = _layernorm(x.astype(jnp.float32) + attn, g1_ref[...], be1_ref[...])

    # --- FeedForward: Linear -> ReLU -> Linear (on the (block_q, D) tile only)
    hmid = jnp.maximum(
        jnp.dot(x1, w1_ref[...], preferred_element_type=jnp.float32) + b1_ref[...], 0.0)
    ff = jnp.dot(hmid, w2_ref[...], preferred_element_type=jnp.float32) + b2_ref[...]

    # --- residual + LayerNorm 2
    x2 = _layernorm(x1 + ff, g2_ref[...], be2_ref[...])
    o_ref[...] = x2.astype(o_ref.dtype)                          # lane-dense (D % 128 == 0)


def transformer_encoder_layer(x, params, num_heads, *, block_q=None):
    B, S, D = x.shape
    assert D % num_heads == 0
    d_k = D // num_heads
    d_mlp = params["w1"].shape[1]
    if block_q is None:
        block_q = min(S, 256)
    block_q = min(block_q, S)
    assert S % block_q == 0, "sequence length must be divisible by block_q"
    n_q = S // block_q

    def const(shape):                       # weights: same block every grid step
        return pl.BlockSpec(shape, lambda b, qi: (0, 0))

    in_specs = [
        # query tile of x
        pl.BlockSpec((pl.Squeezed(), block_q, D), lambda b, qi: (b, qi, 0)),
        # full sequence of x for the K/V projection (same block across q tiles
        # of a batch element -> DMA is skipped on revisits)
        pl.BlockSpec((pl.Squeezed(), S, D), lambda b, qi: (b, 0, 0)),
        const((D, D)), const((1, D)),          # Wq, bq
        const((D, D)), const((1, D)),          # Wk, bk
        const((D, D)), const((1, D)),          # Wv, bv
        const((D, D)), const((1, D)),          # Wo, bo
        const((D, d_mlp)), const((1, d_mlp)),  # W1, b1
        const((d_mlp, D)), const((1, D)),      # W2, b2
        const((1, D)), const((1, D)),          # LN1 gamma, beta
        const((1, D)), const((1, D)),          # LN2 gamma, beta
    ]
    out_spec = pl.BlockSpec((pl.Squeezed(), block_q, D), lambda b, qi: (b, qi, 0))

    # Advisory cost hint for XLA's scheduler.
    flops = 2 * B * S * (4 * D * D + 2 * S * D + 2 * D * d_mlp)
    transcendentals = B * num_heads * S * S
    bytes_accessed = (3 * x.size * x.dtype.itemsize
                      + sum(int(v.size) * v.dtype.itemsize for v in params.values()))

    kernel = functools.partial(encoder_layer_kernel, num_heads)
    return pl.pallas_call(
        kernel,
        out_shape=jax.ShapeDtypeStruct((B, S, D), x.dtype),
        grid_spec=pltpu.PrefetchScalarGridSpec(
            num_scalar_prefetch=0,
            grid=(B, n_q),
            in_specs=in_specs,
            out_specs=out_spec,
            scratch_shapes=[pltpu.VMEM((num_heads, S, d_k), x.dtype),   # K (head-major)
                            pltpu.VMEM((num_heads, S, d_k), x.dtype)],  # V (head-major)
        ),
        compiler_params=pltpu.CompilerParams(
            dimension_semantics=("parallel", "arbitrary"),
            vmem_limit_bytes=64 * 1024 * 1024,
        ),
        cost_estimate=pl.CostEstimate(flops=flops,
                                      transcendentals=transcendentals,
                                      bytes_accessed=bytes_accessed),
    )(x, x,
      params["wq"], params["bq"], params["wk"], params["bk"],
      params["wv"], params["bv"], params["wo"], params["bo"],
      params["w1"], params["b1"], params["w2"], params["b2"],
      params["g1"], params["beta1"], params["g2"], params["beta2"])


def reference(x, params, num_heads):
    """Pure-JAX reference mirroring the PyTorch forward (dropout = identity)."""
    B, S, D = x.shape
    d_k = D // num_heads
    lin = lambda t, w, b: t @ w + b

    q = lin(x, params["wq"], params["bq"]).reshape(B, S, num_heads, d_k).transpose(0, 2, 1, 3)
    k = lin(x, params["wk"], params["bk"]).reshape(B, S, num_heads, d_k).transpose(0, 2, 1, 3)
    v = lin(x, params["wv"], params["bv"]).reshape(B, S, num_heads, d_k).transpose(0, 2, 1, 3)

    score = (q @ k.transpose(0, 1, 3, 2)) / d_k ** 0.5
    attn = jax.nn.softmax(score, axis=-1)
    out = (attn @ v).transpose(0, 2, 1, 3).reshape(B, S, D)
    out = lin(out, params["wo"], params["bo"])

    x1 = _layernorm(x + out, params["g1"], params["beta1"])
    ff = lin(jax.nn.relu(lin(x1, params["w1"], params["b1"])), params["w2"], params["b2"])
    return _layernorm(x1 + ff, params["g2"], params["beta2"])


if __name__ == "__main__":
    # Small but TPU-friendly shapes: lane-dense d_model (multiple of 128),
    # two query tiles per batch element to exercise the K/V scratch reuse.
    B, S, D = 2, 16, 128
    num_heads = 4
    d_mlp = 256
    block_q = 8

    key = jax.random.PRNGKey(0)
    ks = jax.random.split(key, 16)
    rnd = lambda k, shape: jax.random.normal(k, shape, jnp.float32) * 0.05

    # Weights stored already transposed to (in, out) so the kernel does x @ W + b.
    params = {
        "wq": rnd(ks[0], (D, D)), "bq": rnd(ks[1], (1, D)),
        "wk": rnd(ks[2], (D, D)), "bk": rnd(ks[3], (1, D)),
        "wv": rnd(ks[4], (D, D)), "bv": rnd(ks[5], (1, D)),
        "wo": rnd(ks[6], (D, D)), "bo": rnd(ks[7], (1, D)),
        "w1": rnd(ks[8], (D, d_mlp)), "b1": rnd(ks[9], (1, d_mlp)),
        "w2": rnd(ks[10], (d_mlp, D)), "b2": rnd(ks[11], (1, D)),
        "g1": jnp.ones((1, D), jnp.float32), "beta1": jnp.zeros((1, D), jnp.float32),
        "g2": jnp.ones((1, D), jnp.float32), "beta2": jnp.zeros((1, D), jnp.float32),
    }

    x = jax.random.normal(ks[12], (B, S, D), jnp.float32)

    out = transformer_encoder_layer(x, params, num_heads, block_q=block_q)
    out = jax.block_until_ready(out)

    ref = reference(x, params, num_heads)
    assert out.shape == (B, S, D)
    # Tolerance loosened slightly for the approximate (EUP) softmax reciprocal.
    assert jnp.allclose(out, ref, atol=2e-2, rtol=2e-2), "mismatch vs JAX reference"

    print("KERNEL_OK")
</pallas_src>

<mosaic_0001>
module attributes {stable_mosaic.version = 11 : i64} {
  func.func @encoder_layer_kernel(%arg0: i32, %arg1: i32, %arg2: memref<1x8x128xf32, #tpu.memory_space<vmem>>, %arg3: memref<1x16x128xf32, #tpu.memory_space<vmem>>, %arg4: memref<128x128xf32, #tpu.memory_space<vmem>>, %arg5: memref<1x128xf32, #tpu.memory_space<vmem>>, %arg6: memref<128x128xf32, #tpu.memory_space<vmem>>, %arg7: memref<1x128xf32, #tpu.memory_space<vmem>>, %arg8: memref<128x128xf32, #tpu.memory_space<vmem>>, %arg9: memref<1x128xf32, #tpu.memory_space<vmem>>, %arg10: memref<128x128xf32, #tpu.memory_space<vmem>>, %arg11: memref<1x128xf32, #tpu.memory_space<vmem>>, %arg12: memref<128x256xf32, #tpu.memory_space<vmem>>, %arg13: memref<1x256xf32, #tpu.memory_space<vmem>>, %arg14: memref<256x128xf32, #tpu.memory_space<vmem>>, %arg15: memref<1x128xf32, #tpu.memory_space<vmem>>, %arg16: memref<1x128xf32, #tpu.memory_space<vmem>>, %arg17: memref<1x128xf32, #tpu.memory_space<vmem>>, %arg18: memref<1x128xf32, #tpu.memory_space<vmem>>, %arg19: memref<1x128xf32, #tpu.memory_space<vmem>>, %arg20: memref<1x8x128xf32, #tpu.memory_space<vmem>>, %arg21: memref<4x16x32xf32, #tpu.memory_space<vmem>>, %arg22: memref<4x16x32xf32, #tpu.memory_space<vmem>>) attributes {dimension_semantics = [#tpu.dimension_semantics<parallel>, #tpu.dimension_semantics<arbitrary>], iteration_bounds = array<i64: 2, 2>, scalar_prefetch = 0 : i64, scratch_operands = 2 : i64, tpu.core_type = #tpu.core_type<tc>, window_params = [{transform_indices = @transform_0, window_bounds = array<i64: 1, 8, 128>}, {transform_indices = @transform_1, window_bounds = array<i64: 1, 16, 128>}, {pipeline_mode = #tpu.pipeline_mode<synchronous>, transform_indices = @transform_2, window_bounds = array<i64: 128, 128>}, {pipeline_mode = #tpu.pipeline_mode<synchronous>, transform_indices = @transform_3, window_bounds = array<i64: 1, 128>}, {pipeline_mode = #tpu.pipeline_mode<synchronous>, transform_indices = @transform_4, window_bounds = array<i64: 128, 128>}, {pipeline_mode = #tpu.pipeline_mode<synchronous>, transform_indices = @transform_5, window_bounds = array<i64: 1, 128>}, {pipeline_mode = #tpu.pipeline_mode<synchronous>, transform_indices = @transform_6, window_bounds = array<i64: 128, 128>}, {pipeline_mode = #tpu.pipeline_mode<synchronous>, transform_indices = @transform_7, window_bounds = array<i64: 1, 128>}, {pipeline_mode = #tpu.pipeline_mode<synchronous>, transform_indices = @transform_8, window_bounds = array<i64: 128, 128>}, {pipeline_mode = #tpu.pipeline_mode<synchronous>, transform_indices = @transform_9, window_bounds = array<i64: 1, 128>}, {pipeline_mode = #tpu.pipeline_mode<synchronous>, transform_indices = @transform_10, window_bounds = array<i64: 128, 256>}, {pipeline_mode = #tpu.pipeline_mode<synchronous>, transform_indices = @transform_11, window_bounds = array<i64: 1, 256>}, {pipeline_mode = #tpu.pipeline_mode<synchronous>, transform_indices = @transform_12, window_bounds = array<i64: 256, 128>}, {pipeline_mode = #tpu.pipeline_mode<synchronous>, transform_indices = @transform_13, window_bounds = array<i64: 1, 128>}, {pipeline_mode = #tpu.pipeline_mode<synchronous>, transform_indices = @transform_14, window_bounds = array<i64: 1, 128>}, {pipeline_mode = #tpu.pipeline_mode<synchronous>, transform_indices = @transform_15, window_bounds = array<i64: 1, 128>}, {pipeline_mode = #tpu.pipeline_mode<synchronous>, transform_indices = @transform_16, window_bounds = array<i64: 1, 128>}, {pipeline_mode = #tpu.pipeline_mode<synchronous>, transform_indices = @transform_17, window_bounds = array<i64: 1, 128>}, {transform_indices = @transform_18, window_bounds = array<i64: 1, 8, 128>}]} {
    %c0_i32 = arith.constant 0 : i32
    %0 = arith.cmpi eq, %arg1, %c0_i32 : i32
    %1 = arith.extui %0 : i1 to i32
    %c0_i32_0 = arith.constant 0 : i32
    %2 = arith.cmpi ne, %1, %c0_i32_0 : i32
    scf.if %2 {
      %c0_55 = arith.constant 0 : index
      %c0_56 = arith.constant 0 : index
      %c0_57 = arith.constant 0 : index
      %114 = vector.load %arg3[%c0_55, %c0_56, %c0_57] : memref<1x16x128xf32, #tpu.memory_space<vmem>>, vector<1x16x128xf32>
      %115 = vector.shape_cast %114 : vector<1x16x128xf32> to vector<16x128xf32>
      %c0_58 = arith.constant 0 : index
      %c0_59 = arith.constant 0 : index
      %116 = vector.load %arg6[%c0_58, %c0_59] : memref<128x128xf32, #tpu.memory_space<vmem>>, vector<128x128xf32>
      %cst_60 = arith.constant dense<0.000000e+00> : vector<16x128xf32>
      %117 = tpu.matmul %115, %116, %cst_60 {dimension_numbers = #tpu.dot_dimension_numbers<[1], [0], [0], [1], [0, 0, 1, 1], [], []>} : vector<16x128xf32>, vector<128x128xf32>, vector<16x128xf32> -> vector<16x128xf32>
      %c0_61 = arith.constant 0 : index
      %c0_62 = arith.constant 0 : index
      %118 = vector.load %arg7[%c0_61, %c0_62] : memref<1x128xf32, #tpu.memory_space<vmem>>, vector<1x128xf32>
      %119 = vector.broadcast %118 : vector<1x128xf32> to vector<16x128xf32>
      %120 = arith.addf %117, %119 : vector<16x128xf32>
      %c0_63 = arith.constant 0 : index
      %c0_64 = arith.constant 0 : index
      %121 = vector.load %arg8[%c0_63, %c0_64] : memref<128x128xf32, #tpu.memory_space<vmem>>, vector<128x128xf32>
      %cst_65 = arith.constant dense<0.000000e+00> : vector<16x128xf32>
      %122 = tpu.matmul %115, %121, %cst_65 {dimension_numbers = #tpu.dot_dimension_numbers<[1], [0], [0], [1], [0, 0, 1, 1], [], []>} : vector<16x128xf32>, vector<128x128xf32>, vector<16x128xf32> -> vector<16x128xf32>
      %c0_66 = arith.constant 0 : index
      %c0_67 = arith.constant 0 : index
      %123 = vector.load %arg9[%c0_66, %c0_67] : memref<1x128xf32, #tpu.memory_space<vmem>>, vector<1x128xf32>
      %124 = vector.broadcast %123 : vector<1x128xf32> to vector<16x128xf32>
      %125 = arith.addf %122, %124 : vector<16x128xf32>
      %126 = vector.extract_strided_slice %120 {offsets = [0, 0], sizes = [16, 32], strides = [1, 1]} : vector<16x128xf32> to vector<16x32xf32>
      %c0_68 = arith.constant 0 : index
      %c0_69 = arith.constant 0 : index
      %c0_70 = arith.constant 0 : index
      %127 = vector.load %arg21[%c0_68, %c0_69, %c0_70] : memref<4x16x32xf32, #tpu.memory_space<vmem>>, vector<1x16x32xf32>
      %128 = vector.shape_cast %127 : vector<1x16x32xf32> to vector<16x32xf32>
      %129 = vector.shape_cast %126 : vector<16x32xf32> to vector<1x16x32xf32>
      tpu.vector_store %arg21[%c0_68, %c0_69, %c0_70], %129 {strides = array<i32>} : memref<4x16x32xf32, #tpu.memory_space<vmem>>, vector<1x16x32xf32>,
      %130 = vector.extract_strided_slice %125 {offsets = [0, 0], sizes = [16, 32], strides = [1, 1]} : vector<16x128xf32> to vector<16x32xf32>
      %c0_71 = arith.constant 0 : index
      %c0_72 = arith.constant 0 : index
      %c0_73 = arith.constant 0 : index
      %131 = vector.load %arg22[%c0_71, %c0_72, %c0_73] : memref<4x16x32xf32, #tpu.memory_space<vmem>>, vector<1x16x32xf32>
      %132 = vector.shape_cast %131 : vector<1x16x32xf32> to vector<16x32xf32>
      %133 = vector.shape_cast %130 : vector<16x32xf32> to vector<1x16x32xf32>
      tpu.vector_store %arg22[%c0_71, %c0_72, %c0_73], %133 {strides = array<i32>} : memref<4x16x32xf32, #tpu.memory_space<vmem>>, vector<1x16x32xf32>,
      %134 = vector.extract_strided_slice %120 {offsets = [0, 32], sizes = [16, 32], strides = [1, 1]} : vector<16x128xf32> to vector<16x32xf32>
      %c1 = arith.constant 1 : index
      %c0_74 = arith.constant 0 : index
      %c0_75 = arith.constant 0 : index
      %135 = vector.load %arg21[%c1, %c0_74, %c0_75] : memref<4x16x32xf32, #tpu.memory_space<vmem>>, vector<1x16x32xf32>
      %136 = vector.shape_cast %135 : vector<1x16x32xf32> to vector<16x32xf32>
      %137 = vector.shape_cast %134 : vector<16x32xf32> to vector<1x16x32xf32>
      tpu.vector_store %arg21[%c1, %c0_74, %c0_75], %137 {strides = array<i32>} : memref<4x16x32xf32, #tpu.memory_space<vmem>>, vector<1x16x32xf32>,
      %138 = vector.extract_strided_slice %125 {offsets = [0, 32], sizes = [16, 32], strides = [1, 1]} : vector<16x128xf32> to vector<16x32xf32>
      %c1_76 = arith.constant 1 : index
      %c0_77 = arith.constant 0 : index
      %c0_78 = arith.constant 0 : index
      %139 = vector.load %arg22[%c1_76, %c0_77, %c0_78] : memref<4x16x32xf32, #tpu.memory_space<vmem>>, vector<1x16x32xf32>
      %140 = vector.shape_cast %139 : vector<1x16x32xf32> to vector<16x32xf32>
      %141 = vector.shape_cast %138 : vector<16x32xf32> to vector<1x16x32xf32>
      tpu.vector_store %arg22[%c1_76, %c0_77, %c0_78], %141 {strides = array<i32>} : memref<4x16x32xf32, #tpu.memory_space<vmem>>, vector<1x16x32xf32>,
      %142 = vector.extract_strided_slice %120 {offsets = [0, 64], sizes = [16, 32], strides = [1, 1]} : vector<16x128xf32> to vector<16x32xf32>
      %c2 = arith.constant 2 : index
      %c0_79 = arith.constant 0 : index
      %c0_80 = arith.constant 0 : index
      %143 = vector.load %arg21[%c2, %c0_79, %c0_80] : memref<4x16x32xf32, #tpu.memory_space<vmem>>, vector<1x16x32xf32>
      %144 = vector.shape_cast %143 : vector<1x16x32xf32> to vector<16x32xf32>
      %145 = vector.shape_cast %142 : vector<16x32xf32> to vector<1x16x32xf32>
      tpu.vector_store %arg21[%c2, %c0_79, %c0_80], %145 {strides = array<i32>} : memref<4x16x32xf32, #tpu.memory_space<vmem>>, vector<1x16x32xf32>,
      %146 = vector.extract_strided_slice %125 {offsets = [0, 64], sizes = [16, 32], strides = [1, 1]} : vector<16x128xf32> to vector<16x32xf32>
      %c2_81 = arith.constant 2 : index
      %c0_82 = arith.constant 0 : index
      %c0_83 = arith.constant 0 : index
      %147 = vector.load %arg22[%c2_81, %c0_82, %c0_83] : memref<4x16x32xf32, #tpu.memory_space<vmem>>, vector<1x16x32xf32>
      %148 = vector.shape_cast %147 : vector<1x16x32xf32> to vector<16x32xf32>
      %149 = vector.shape_cast %146 : vector<16x32xf32> to vector<1x16x32xf32>
      tpu.vector_store %arg22[%c2_81, %c0_82, %c0_83], %149 {strides = array<i32>} : memref<4x16x32xf32, #tpu.memory_space<vmem>>, vector<1x16x32xf32>,
      %150 = vector.extract_strided_slice %120 {offsets = [0, 96], sizes = [16, 32], strides = [1, 1]} : vector<16x128xf32> to vector<16x32xf32>
      %c3 = arith.constant 3 : index
      %c0_84 = arith.constant 0 : index
      %c0_85 = arith.constant 0 : index
      %151 = vector.load %arg21[%c3, %c0_84, %c0_85] : memref<4x16x32xf32, #tpu.memory_space<vmem>>, vector<1x16x32xf32>
      %152 = vector.shape_cast %151 : vector<1x16x32xf32> to vector<16x32xf32>
      %153 = vector.shape_cast %150 : vector<16x32xf32> to vector<1x16x32xf32>
      tpu.vector_store %arg21[%c3, %c0_84, %c0_85], %153 {strides = array<i32>} : memref<4x16x32xf32, #tpu.memory_space<vmem>>, vector<1x16x32xf32>,
      %154 = vector.extract_strided_slice %125 {offsets = [0, 96], sizes = [16, 32], strides = [1, 1]} : vector<16x128xf32> to vector<16x32xf32>
      %c3_86 = arith.constant 3 : index
      %c0_87 = arith.constant 0 : index
      %c0_88 = arith.constant 0 : index
      %155 = vector.load %arg22[%c3_86, %c0_87, %c0_88] : memref<4x16x32xf32, #tpu.memory_space<vmem>>, vector<1x16x32xf32>
      %156 = vector.shape_cast %155 : vector<1x16x32xf32> to vector<16x32xf32>
      %157 = vector.shape_cast %154 : vector<16x32xf32> to vector<1x16x32xf32>
      tpu.vector_store %arg22[%c3_86, %c0_87, %c0_88], %157 {strides = array<i32>} : memref<4x16x32xf32, #tpu.memory_space<vmem>>, vector<1x16x32xf32>,
    } else {
    }
    %c0 = arith.constant 0 : index
    %c0_1 = arith.constant 0 : index
    %c0_2 = arith.constant 0 : index
    %3 = vector.load %arg2[%c0, %c0_1, %c0_2] : memref<1x8x128xf32, #tpu.memory_space<vmem>>, vector<1x8x128xf32>
    %4 = vector.shape_cast %3 : vector<1x8x128xf32> to vector<8x128xf32>
    %c0_3 = arith.constant 0 : index
    %c0_4 = arith.constant 0 : index
    %5 = vector.load %arg4[%c0_3, %c0_4] : memref<128x128xf32, #tpu.memory_space<vmem>>, vector<128x128xf32>
    %cst = arith.constant dense<0.000000e+00> : vector<8x128xf32>
    %6 = tpu.matmul %4, %5, %cst {dimension_numbers = #tpu.dot_dimension_numbers<[1], [0], [0], [1], [0, 0, 1, 1], [], []>} : vector<8x128xf32>, vector<128x128xf32>, vector<8x128xf32> -> vector<8x128xf32>
    %c0_5 = arith.constant 0 : index
    %c0_6 = arith.constant 0 : index
    %7 = vector.load %arg5[%c0_5, %c0_6] : memref<1x128xf32, #tpu.memory_space<vmem>>, vector<1x128xf32>
    %8 = vector.broadcast %7 : vector<1x128xf32> to vector<8x128xf32>
    %9 = arith.addf %6, %8 : vector<8x128xf32>
    %cst_7 = arith.constant 0.176776692 : f32
    %10 = vector.broadcast %cst_7 : f32 to vector<8x128xf32>
    %11 = arith.mulf %9, %10 : vector<8x128xf32>
    %12 = vector.extract_strided_slice %11 {offsets = [0, 0], sizes = [8, 32], strides = [1, 1]} : vector<8x128xf32> to vector<8x32xf32>
    %13 = vector.extract_strided_slice %11 {offsets = [0, 32], sizes = [8, 32], strides = [1, 1]} : vector<8x128xf32> to vector<8x32xf32>
    %14 = vector.extract_strided_slice %11 {offsets = [0, 64], sizes = [8, 32], strides = [1, 1]} : vector<8x128xf32> to vector<8x32xf32>
    %15 = vector.extract_strided_slice %11 {offsets = [0, 96], sizes = [8, 32], strides = [1, 1]} : vector<8x128xf32> to vector<8x32xf32>
    %16 = vector.shape_cast %12 : vector<8x32xf32> to vector<1x8x32xf32>
    %17 = vector.shape_cast %13 : vector<8x32xf32> to vector<1x8x32xf32>
    %18 = vector.shape_cast %14 : vector<8x32xf32> to vector<1x8x32xf32>
    %19 = vector.shape_cast %15 : vector<8x32xf32> to vector<1x8x32xf32>
    %20 = tpu.concatenate %16, %17, %18, %19 in 0 : vector<1x8x32xf32>, vector<1x8x32xf32>, vector<1x8x32xf32>, vector<1x8x32xf32> -> vector<4x8x32xf32>
    %c0_8 = arith.constant 0 : index
    %c0_9 = arith.constant 0 : index
    %c0_10 = arith.constant 0 : index
    %21 = vector.load %arg21[%c0_8, %c0_9, %c0_10] : memref<4x16x32xf32, #tpu.memory_space<vmem>>, vector<4x16x32xf32>
    %c0_11 = arith.constant 0 : index
    %c0_12 = arith.constant 0 : index
    %c0_13 = arith.constant 0 : index
    %22 = vector.load %arg22[%c0_11, %c0_12, %c0_13] : memref<4x16x32xf32, #tpu.memory_space<vmem>>, vector<4x16x32xf32>
    "tpu.trace_start"() <{level = 10 : i32, message = "hqd,hkd->hqk"}> : () -> ()
    %cst_14 = arith.constant dense<0.000000e+00> : vector<4x8x16xf32>
    %23 = tpu.matmul %20, %21, %cst_14 {dimension_numbers = #tpu.dot_dimension_numbers<[2], [2], [1], [1], [0, 0, 0, 1, 1, 1], [0], [0]>} : vector<4x8x32xf32>, vector<4x16x32xf32>, vector<4x8x16xf32> -> vector<4x8x16xf32>
    "tpu.trace_stop"() : () -> ()
    %cst_15 = arith.constant dense<0xFF800000> : vector<4x8xf32>
    %24 = vector.multi_reduction <maximumf>, %23, %cst_15 [2] : vector<4x8x16xf32> to vector<4x8xf32>
    %25 = vector.shape_cast %24 : vector<4x8xf32> to vector<4x8x1xf32>
    %26 = vector.broadcast %25 : vector<4x8x1xf32> to vector<4x8x16xf32>
    %27 = arith.subf %23, %26 : vector<4x8x16xf32>
    %28 = math.exp %27 : vector<4x8x16xf32>
    %cst_16 = arith.constant dense<0.000000e+00> : vector<4x8xf32>
    %29 = vector.multi_reduction <add>, %28, %cst_16 [2] : vector<4x8x16xf32> to vector<4x8xf32>
    %30 = vector.shape_cast %29 : vector<4x8xf32> to vector<4x8x1xf32>
    %31 = tpu.reciprocal %30 {approx = true} : vector<4x8x1xf32> -> vector<4x8x1xf32>
    %32 = vector.broadcast %31 : vector<4x8x1xf32> to vector<4x8x16xf32>
    %33 = arith.mulf %28, %32 : vector<4x8x16xf32>
    "tpu.trace_start"() <{level = 10 : i32, message = "hqk,hkd->hqd"}> : () -> ()
    %cst_17 = arith.constant dense<0.000000e+00> : vector<4x8x32xf32>
    %34 = tpu.matmul %33, %22, %cst_17 {dimension_numbers = #tpu.dot_dimension_numbers<[2], [1], [1], [2], [0, 0, 0, 1, 1, 2], [0], [0]>} : vector<4x8x16xf32>, vector<4x16x32xf32>, vector<4x8x32xf32> -> vector<4x8x32xf32>
    "tpu.trace_stop"() : () -> ()
    %35 = vector.extract_strided_slice %34 {offsets = [0, 0, 0], sizes = [1, 8, 32], strides = [1, 1, 1]} : vector<4x8x32xf32> to vector<1x8x32xf32>
    %36 = vector.shape_cast %35 : vector<1x8x32xf32> to vector<8x32xf32>
    %37 = vector.extract_strided_slice %34 {offsets = [1, 0, 0], sizes = [1, 8, 32], strides = [1, 1, 1]} : vector<4x8x32xf32> to vector<1x8x32xf32>
    %38 = vector.shape_cast %37 : vector<1x8x32xf32> to vector<8x32xf32>
    %39 = vector.extract_strided_slice %34 {offsets = [2, 0, 0], sizes = [1, 8, 32], strides = [1, 1, 1]} : vector<4x8x32xf32> to vector<1x8x32xf32>
    %40 = vector.shape_cast %39 : vector<1x8x32xf32> to vector<8x32xf32>
    %41 = vector.extract_strided_slice %34 {offsets = [3, 0, 0], sizes = [1, 8, 32], strides = [1, 1, 1]} : vector<4x8x32xf32> to vector<1x8x32xf32>
    %42 = vector.shape_cast %41 : vector<1x8x32xf32> to vector<8x32xf32>
    %43 = tpu.concatenate %36, %38, %40, %42 in 1 : vector<8x32xf32>, vector<8x32xf32>, vector<8x32xf32>, vector<8x32xf32> -> vector<8x128xf32>
    %c0_18 = arith.constant 0 : index
    %c0_19 = arith.constant 0 : index
    %44 = vector.load %arg10[%c0_18, %c0_19] : memref<128x128xf32, #tpu.memory_space<vmem>>, vector<128x128xf32>
    %cst_20 = arith.constant dense<0.000000e+00> : vector<8x128xf32>
    %45 = tpu.matmul %43, %44, %cst_20 {dimension_numbers = #tpu.dot_dimension_numbers<[1], [0], [0], [1], [0, 0, 1, 1], [], []>} : vector<8x128xf32>, vector<128x128xf32>, vector<8x128xf32> -> vector<8x128xf32>
    %c0_21 = arith.constant 0 : index
    %c0_22 = arith.constant 0 : index
    %46 = vector.load %arg11[%c0_21, %c0_22] : memref<1x128xf32, #tpu.memory_space<vmem>>, vector<1x128xf32>
    %47 = vector.broadcast %46 : vector<1x128xf32> to vector<8x128xf32>
    %48 = arith.addf %45, %47 : vector<8x128xf32>
    %49 = arith.addf %4, %48 : vector<8x128xf32>
    %c0_23 = arith.constant 0 : index
    %c0_24 = arith.constant 0 : index
    %50 = vector.load %arg16[%c0_23, %c0_24] : memref<1x128xf32, #tpu.memory_space<vmem>>, vector<1x128xf32>
    %c0_25 = arith.constant 0 : index
    %c0_26 = arith.constant 0 : index
    %51 = vector.load %arg17[%c0_25, %c0_26] : memref<1x128xf32, #tpu.memory_space<vmem>>, vector<1x128xf32>
    %cst_27 = arith.constant dense<0.000000e+00> : vector<8xf32>
    %52 = vector.multi_reduction <add>, %49, %cst_27 [1] : vector<8x128xf32> to vector<8xf32>
    %53 = vector.shape_cast %52 : vector<8xf32> to vector<8x1xf32>
    %cst_28 = arith.constant 1.280000e+02 : f32
    %54 = vector.broadcast %cst_28 : f32 to vector<8x1xf32>
    %55 = arith.divf %53, %54 : vector<8x1xf32>
    %56 = vector.broadcast %55 : vector<8x1xf32> to vector<8x128xf32>
    %57 = arith.subf %49, %56 : vector<8x128xf32>
    %58 = arith.mulf %57, %57 : vector<8x128xf32>
    %cst_29 = arith.constant dense<0.000000e+00> : vector<8xf32>
    %59 = vector.multi_reduction <add>, %58, %cst_29 [1] : vector<8x128xf32> to vector<8xf32>
    %60 = vector.shape_cast %59 : vector<8xf32> to vector<8x1xf32>
    %cst_30 = arith.constant 1.280000e+02 : f32
    %61 = vector.broadcast %cst_30 : f32 to vector<8x1xf32>
    %62 = arith.divf %60, %61 : vector<8x1xf32>
    %63 = vector.broadcast %55 : vector<8x1xf32> to vector<8x128xf32>
    %64 = arith.subf %49, %63 : vector<8x128xf32>
    %cst_31 = arith.constant 9.99999974E-6 : f32
    %65 = vector.broadcast %cst_31 : f32 to vector<8x1xf32>
    %66 = arith.addf %62, %65 : vector<8x1xf32>
    %67 = math.rsqrt %66 : vector<8x1xf32>
    %68 = vector.broadcast %67 : vector<8x1xf32> to vector<8x128xf32>
    %69 = arith.mulf %64, %68 : vector<8x128xf32>
    %70 = vector.broadcast %50 : vector<1x128xf32> to vector<8x128xf32>
    %71 = arith.mulf %69, %70 : vector<8x128xf32>
    %72 = vector.broadcast %51 : vector<1x128xf32> to vector<8x128xf32>
    %73 = arith.addf %71, %72 : vector<8x128xf32>
    %c0_32 = arith.constant 0 : index
    %c0_33 = arith.constant 0 : index
    %74 = vector.load %arg12[%c0_32, %c0_33] : memref<128x256xf32, #tpu.memory_space<vmem>>, vector<128x256xf32>
    %cst_34 = arith.constant dense<0.000000e+00> : vector<8x256xf32>
    %75 = tpu.matmul %73, %74, %cst_34 {dimension_numbers = #tpu.dot_dimension_numbers<[1], [0], [0], [1], [0, 0, 1, 1], [], []>} : vector<8x128xf32>, vector<128x256xf32>, vector<8x256xf32> -> vector<8x256xf32>
    %c0_35 = arith.constant 0 : index
    %c0_36 = arith.constant 0 : index
    %76 = vector.load %arg13[%c0_35, %c0_36] : memref<1x256xf32, #tpu.memory_space<vmem>>, vector<1x256xf32>
    %77 = vector.broadcast %76 : vector<1x256xf32> to vector<8x256xf32>
    %78 = arith.addf %75, %77 : vector<8x256xf32>
    %cst_37 = arith.constant 0.000000e+00 : f32
    %79 = vector.broadcast %cst_37 : f32 to vector<8x256xf32>
    %80 = arith.maximumf %78, %79 : vector<8x256xf32>
    %c0_38 = arith.constant 0 : index
    %c0_39 = arith.constant 0 : index
    %81 = vector.load %arg14[%c0_38, %c0_39] : memref<256x128xf32, #tpu.memory_space<vmem>>, vector<256x128xf32>
    %cst_40 = arith.constant dense<0.000000e+00> : vector<8x128xf32>
    %82 = tpu.matmul %80, %81, %cst_40 {dimension_numbers = #tpu.dot_dimension_numbers<[1], [0], [0], [1], [0, 0, 1, 1], [], []>} : vector<8x256xf32>, vector<256x128xf32>, vector<8x128xf32> -> vector<8x128xf32>
    %c0_41 = arith.constant 0 : index
    %c0_42 = arith.constant 0 : index
    %83 = vector.load %arg15[%c0_41, %c0_42] : memref<1x128xf32, #tpu.memory_space<vmem>>, vector<1x128xf32>
    %84 = vector.broadcast %83 : vector<1x128xf32> to vector<8x128xf32>
    %85 = arith.addf %82, %84 : vector<8x128xf32>
    %86 = arith.addf %73, %85 : vector<8x128xf32>
    %c0_43 = arith.constant 0 : index
    %c0_44 = arith.constant 0 : index
    %87 = vector.load %arg18[%c0_43, %c0_44] : memref<1x128xf32, #tpu.memory_space<vmem>>, vector<1x128xf32>
    %c0_45 = arith.constant 0 : index
    %c0_46 = arith.constant 0 : index
    %88 = vector.load %arg19[%c0_45, %c0_46] : memref<1x128xf32, #tpu.memory_space<vmem>>, vector<1x128xf32>
    %cst_47 = arith.constant dense<0.000000e+00> : vector<8xf32>
    %89 = vector.multi_reduction <add>, %86, %cst_47 [1] : vector<8x128xf32> to vector<8xf32>
    %90 = vector.shape_cast %89 : vector<8xf32> to vector<8x1xf32>
    %cst_48 = arith.constant 1.280000e+02 : f32
    %91 = vector.broadcast %cst_48 : f32 to vector<8x1xf32>
    %92 = arith.divf %90, %91 : vector<8x1xf32>
    %93 = vector.broadcast %92 : vector<8x1xf32> to vector<8x128xf32>
    %94 = arith.subf %86, %93 : vector<8x128xf32>
    %95 = arith.mulf %94, %94 : vector<8x128xf32>
    %cst_49 = arith.constant dense<0.000000e+00> : vector<8xf32>
    %96 = vector.multi_reduction <add>, %95, %cst_49 [1] : vector<8x128xf32> to vector<8xf32>
    %97 = vector.shape_cast %96 : vector<8xf32> to vector<8x1xf32>
    %cst_50 = arith.constant 1.280000e+02 : f32
    %98 = vector.broadcast %cst_50 : f32 to vector<8x1xf32>
    %99 = arith.divf %97, %98 : vector<8x1xf32>
    %100 = vector.broadcast %92 : vector<8x1xf32> to vector<8x128xf32>
    %101 = arith.subf %86, %100 : vector<8x128xf32>
    %cst_51 = arith.constant 9.99999974E-6 : f32
    %102 = vector.broadcast %cst_51 : f32 to vector<8x1xf32>
    %103 = arith.addf %99, %102 : vector<8x1xf32>
    %104 = math.rsqrt %103 : vector<8x1xf32>
    %105 = vector.broadcast %104 : vector<8x1xf32> to vector<8x128xf32>
    %106 = arith.mulf %101, %105 : vector<8x128xf32>
    %107 = vector.broadcast %87 : vector<1x128xf32> to vector<8x128xf32>
    %108 = arith.mulf %106, %107 : vector<8x128xf32>
    %109 = vector.broadcast %88 : vector<1x128xf32> to vector<8x128xf32>
    %110 = arith.addf %108, %109 : vector<8x128xf32>
    %c0_52 = arith.constant 0 : index
    %c0_53 = arith.constant 0 : index
    %c0_54 = arith.constant 0 : index
    %111 = vector.load %arg20[%c0_52, %c0_53, %c0_54] : memref<1x8x128xf32, #tpu.memory_space<vmem>>, vector<1x8x128xf32>
    %112 = vector.shape_cast %111 : vector<1x8x128xf32> to vector<8x128xf32>
    %113 = vector.shape_cast %110 : vector<8x128xf32> to vector<1x8x128xf32>
    tpu.vector_store %arg20[%c0_52, %c0_53, %c0_54], %113 {strides = array<i32>} : memref<1x8x128xf32, #tpu.memory_space<vmem>>, vector<1x8x128xf32>,
    return
  }
  func.func @transform_0(%arg0: i32, %arg1: i32) -> (i32, i32, i32) {
    %c0_i32 = arith.constant 0 : i32
    %c0_i32_0 = arith.constant 0 : i32
    return %arg0, %arg1, %c0_i32 : i32, i32, i32
  }
  func.func @transform_1(%arg0: i32, %arg1: i32) -> (i32, i32, i32) {
    %c0_i32 = arith.constant 0 : i32
    %c0_i32_0 = arith.constant 0 : i32
    %c0_i32_1 = arith.constant 0 : i32
    return %arg0, %c0_i32, %c0_i32_0 : i32, i32, i32
  }
  func.func @transform_2(%arg0: i32, %arg1: i32) -> (i32, i32) {
    %c0_i32 = arith.constant 0 : i32
    %c0_i32_0 = arith.constant 0 : i32
    %c0_i32_1 = arith.constant 0 : i32
    return %c0_i32, %c0_i32_0 : i32, i32
  }
  func.func @transform_3(%arg0: i32, %arg1: i32) -> (i32, i32) {
    %c0_i32 = arith.constant 0 : i32
    %c0_i32_0 = arith.constant 0 : i32
    %c0_i32_1 = arith.constant 0 : i32
    return %c0_i32, %c0_i32_0 : i32, i32
  }
  func.func @transform_4(%arg0: i32, %arg1: i32) -> (i32, i32) {
    %c0_i32 = arith.constant 0 : i32
    %c0_i32_0 = arith.constant 0 : i32
    %c0_i32_1 = arith.constant 0 : i32
    return %c0_i32, %c0_i32_0 : i32, i32
  }
  func.func @transform_5(%arg0: i32, %arg1: i32) -> (i32, i32) {
    %c0_i32 = arith.constant 0 : i32
    %c0_i32_0 = arith.constant 0 : i32
    %c0_i32_1 = arith.constant 0 : i32
    return %c0_i32, %c0_i32_0 : i32, i32
  }
  func.func @transform_6(%arg0: i32, %arg1: i32) -> (i32, i32) {
    %c0_i32 = arith.constant 0 : i32
    %c0_i32_0 = arith.constant 0 : i32
    %c0_i32_1 = arith.constant 0 : i32
    return %c0_i32, %c0_i32_0 : i32, i32
  }
  func.func @transform_7(%arg0: i32, %arg1: i32) -> (i32, i32) {
    %c0_i32 = arith.constant 0 : i32
    %c0_i32_0 = arith.constant 0 : i32
    %c0_i32_1 = arith.constant 0 : i32
    return %c0_i32, %c0_i32_0 : i32, i32
  }
  func.func @transform_8(%arg0: i32, %arg1: i32) -> (i32, i32) {
    %c0_i32 = arith.constant 0 : i32
    %c0_i32_0 = arith.constant 0 : i32
    %c0_i32_1 = arith.constant 0 : i32
    return %c0_i32, %c0_i32_0 : i32, i32
  }
  func.func @transform_9(%arg0: i32, %arg1: i32) -> (i32, i32) {
    %c0_i32 = arith.constant 0 : i32
    %c0_i32_0 = arith.constant 0 : i32
    %c0_i32_1 = arith.constant 0 : i32
    return %c0_i32, %c0_i32_0 : i32, i32
  }
  func.func @transform_10(%arg0: i32, %arg1: i32) -> (i32, i32) {
    %c0_i32 = arith.constant 0 : i32
    %c0_i32_0 = arith.constant 0 : i32
    %c0_i32_1 = arith.constant 0 : i32
    return %c0_i32, %c0_i32_0 : i32, i32
  }
  func.func @transform_11(%arg0: i32, %arg1: i32) -> (i32, i32) {
    %c0_i32 = arith.constant 0 : i32
    %c0_i32_0 = arith.constant 0 : i32
    %c0_i32_1 = arith.constant 0 : i32
    return %c0_i32, %c0_i32_0 : i32, i32
  }
  func.func @transform_12(%arg0: i32, %arg1: i32) -> (i32, i32) {
    %c0_i32 = arith.constant 0 : i32
    %c0_i32_0 = arith.constant 0 : i32
    %c0_i32_1 = arith.constant 0 : i32
    return %c0_i32, %c0_i32_0 : i32, i32
  }
  func.func @transform_13(%arg0: i32, %arg1: i32) -> (i32, i32) {
    %c0_i32 = arith.constant 0 : i32
    %c0_i32_0 = arith.constant 0 : i32
    %c0_i32_1 = arith.constant 0 : i32
    return %c0_i32, %c0_i32_0 : i32, i32
  }
  func.func @transform_14(%arg0: i32, %arg1: i32) -> (i32, i32) {
    %c0_i32 = arith.constant 0 : i32
    %c0_i32_0 = arith.constant 0 : i32
    %c0_i32_1 = arith.constant 0 : i32
    return %c0_i32, %c0_i32_0 : i32, i32
  }
  func.func @transform_15(%arg0: i32, %arg1: i32) -> (i32, i32) {
    %c0_i32 = arith.constant 0 : i32
    %c0_i32_0 = arith.constant 0 : i32
    %c0_i32_1 = arith.constant 0 : i32
    return %c0_i32, %c0_i32_0 : i32, i32
  }
  func.func @transform_16(%arg0: i32, %arg1: i32) -> (i32, i32) {
    %c0_i32 = arith.constant 0 : i32
    %c0_i32_0 = arith.constant 0 : i32
    %c0_i32_1 = arith.constant 0 : i32
    return %c0_i32, %c0_i32_0 : i32, i32
  }
  func.func @transform_17(%arg0: i32, %arg1: i32) -> (i32, i32) {
    %c0_i32 = arith.constant 0 : i32
    %c0_i32_0 = arith.constant 0 : i32
    %c0_i32_1 = arith.constant 0 : i32
    return %c0_i32, %c0_i32_0 : i32, i32
  }
  func.func @transform_18(%arg0: i32, %arg1: i32) -> (i32, i32, i32) {
    %c0_i32 = arith.constant 0 : i32
    %c0_i32_0 = arith.constant 0 : i32
    return %arg0, %arg1, %c0_i32 : i32, i32, i32
  }
}

</mosaic_0001>

<llo_original>
// kernel: tpu_custom_call.1
$region0: #{tpu_custom_call.1}
  #allocation0 [shape = 'u32[]', space=smem, size = 0x4, offset = 0x4, fixed_abs, tag = 'smem constant byte address 0x4 - core index']
  #allocation1 [shape = 'u32[144,128]{1,0:T(1,128)}', space=vmem, size = 0x12000, scoped, tag = 'internal scratch']
  #allocation2 [shape = 'f32[4,16,32]{2,1,0:T(8,128)}', space=vmem, size = 0x8000, scoped, tag = 'scratch operand']
  #allocation3 [shape = 'f32[4,16,32]{2,1,0:T(8,128)}', space=vmem, size = 0x8000, scoped, tag = 'scratch operand']
  %s0 = inlined_call_operand.hbm [shape: f32[2,16,128], index: 0, kind: input, shape index: {}]
  %s1 = inlined_call_operand.hbm [shape: f32[2,16,128], index: 1, kind: input, shape index: {}]
  %s2 = inlined_call_operand.hbm [shape: f32[128,128], index: 2, kind: input, shape index: {}]
  %s3 = inlined_call_operand.hbm [shape: f32[1,128], index: 3, kind: input, shape index: {}]
  %s4 = inlined_call_operand.hbm [shape: f32[128,128], index: 4, kind: input, shape index: {}]
  %s5 = inlined_call_operand.hbm [shape: f32[1,128], index: 5, kind: input, shape index: {}]
  %s6 = inlined_call_operand.hbm [shape: f32[128,128], index: 6, kind: input, shape index: {}]
  %s7 = inlined_call_operand.hbm [shape: f32[1,128], index: 7, kind: input, shape index: {}]
  %s8 = inlined_call_operand.hbm [shape: f32[128,128], index: 8, kind: input, shape index: {}]
  %s9 = inlined_call_operand.hbm [shape: f32[1,128], index: 9, kind: input, shape index: {}]
  %s10 = inlined_call_operand.hbm [shape: f32[128,256], index: 10, kind: input, shape index: {}]
  %s11 = inlined_call_operand.hbm [shape: f32[1,256], index: 11, kind: input, shape index: {}]
  %s12 = inlined_call_operand.hbm [shape: f32[256,128], index: 12, kind: input, shape index: {}]
  %s13 = inlined_call_operand.hbm [shape: f32[1,128], index: 13, kind: input, shape index: {}]
  %s14 = inlined_call_operand.hbm [shape: f32[1,128], index: 14, kind: input, shape index: {}]
  %s15 = inlined_call_operand.hbm [shape: f32[1,128], index: 15, kind: input, shape index: {}]
  %s16 = inlined_call_operand.hbm [shape: f32[1,128], index: 16, kind: input, shape index: {}]
  %s17 = inlined_call_operand.hbm [shape: f32[1,128], index: 17, kind: input, shape index: {}]
  %s18 = inlined_call_operand.hbm [shape: f32[2,16,128], index: 18, kind: output, shape index: {}]
  %s19 = sld [smem:[#allocation0]]
  $region181: #{tpu_custom_call.1} parent=0
    _
  %s21 = ssub.s32 1, %s19
  %s22 = scalar_select 0, %s21, %s19
  $region1: #{tpu_custom_call.1} parent=0
    #allocation4 [shape = 'u8[8192]{0}', space=vmem, size = 0x2000, scoped, tag = 'input window, operand 0']
    #allocation5 [shape = 's32[2]{0}', space=sflag, size = 0x8, scoped, tag = 'scoped memory for tpu_custom_call.1']
    #allocation6 [shape = 's32[2]{0}', space=sflag, size = 0x8, scoped, tag = 'scoped memory for tpu_custom_call.1']
    #allocation7 [shape = 'u8[16384]{0}', space=vmem, size = 0x4000, scoped, tag = 'input window, operand 1']
    #allocation8 [shape = 's32[2]{0}', space=sflag, size = 0x8, scoped, tag = 'scoped memory for tpu_custom_call.1']
    #allocation9 [shape = 'u8[65536]{0}', space=vmem, size = 0x10000, scoped, tag = 'input window, operand 2, single buffered']
    #allocation10 [shape = 'u8[512]{0}', space=vmem, size = 0x400, scoped, tag = 'input window, operand 3, single buffered']
    #allocation11 [shape = 's32[1]{0}', space=sflag, size = 0x4, scoped, tag = 'scoped memory for tpu_custom_call.1']
    #allocation12 [shape = 'u8[65536]{0}', space=vmem, size = 0x10000, scoped, tag = 'input window, operand 4, single buffered']
    #allocation13 [shape = 'u8[512]{0}', space=vmem, size = 0x400, scoped, tag = 'input window, operand 5, single buffered']
    #allocation14 [shape = 's32[1]{0}', space=sflag, size = 0x4, scoped, tag = 'scoped memory for tpu_custom_call.1']
    #allocation15 [shape = 'u8[65536]{0}', space=vmem, size = 0x10000, scoped, tag = 'input window, operand 6, single buffered']
    #allocation16 [shape = 'u8[512]{0}', space=vmem, size = 0x400, scoped, tag = 'input window, operand 7, single buffered']
    #allocation17 [shape = 's32[1]{0}', space=sflag, size = 0x4, scoped, tag = 'scoped memory for tpu_custom_call.1']
    #allocation18 [shape = 'u8[65536]{0}', space=vmem, size = 0x10000, scoped, tag = 'input window, operand 8, single buffered']
    #allocation19 [shape = 'u8[512]{0}', space=vmem, size = 0x400, scoped, tag = 'input window, operand 9, single buffered']
    #allocation20 [shape = 's32[1]{0}', space=sflag, size = 0x4, scoped, tag = 'scoped memory for tpu_custom_call.1']
    #allocation21 [shape = 'u8[131072]{0}', space=vmem, size = 0x20000, scoped, tag = 'input window, operand 10, single buffered']
    #allocation22 [shape = 'u8[1024]{0}', space=vmem, size = 0x400, scoped, tag = 'input window, operand 11, single buffered']
    #allocation23 [shape = 's32[1]{0}', space=sflag, size = 0x4, scoped, tag = 'scoped memory for tpu_custom_call.1']
    #allocation24 [shape = 'u8[131072]{0}', space=vmem, size = 0x20000, scoped, tag = 'input window, operand 12, single buffered']
    #allocation25 [shape = 'u8[512]{0}', space=vmem, size = 0x400, scoped, tag = 'input window, operand 13, single buffered']
    #allocation26 [shape = 's32[1]{0}', space=sflag, size = 0x4, scoped, tag = 'scoped memory for tpu_custom_call.1']
    #allocation27 [shape = 'u8[512]{0}', space=vmem, size = 0x400, scoped, tag = 'input window, operand 14, single buffered']
    #allocation28 [shape = 'u8[512]{0}', space=vmem, size = 0x400, scoped, tag = 'input window, operand 15, single buffered']
    #allocation29 [shape = 's32[1]{0}', space=sflag, size = 0x4, scoped, tag = 'scoped memory for tpu_custom_call.1']
    #allocation30 [shape = 'u8[512]{0}', space=vmem, size = 0x400, scoped, tag = 'input window, operand 16, single buffered']
    #allocation31 [shape = 'u8[512]{0}', space=vmem, size = 0x400, scoped, tag = 'input window, operand 17, single buffered']
    #allocation32 [shape = 's32[1]{0}', space=sflag, size = 0x4, scoped, tag = 'scoped memory for tpu_custom_call.1']
    #allocation33 [shape = 'u8[8192]{0}', space=vmem, size = 0x2000, scoped, tag = 'output window, operand 0']
    %23 = vsyncpa [#allocation5], 0
    %s24 = scalar_lea.sflag [#allocation5], 1
    %25 = vsyncpa %s24, 0
    %26 = vsyncpa [#allocation8], 0
    %s27 = scalar_lea.sflag [#allocation8], 1
    %28 = vsyncpa %s27, 0
    %29 = vsyncpa [#allocation11], 0
    %30 = vsyncpa [#allocation14], 0
    %31 = vsyncpa [#allocation17], 0
    %32 = vsyncpa [#allocation20], 0
    %33 = vsyncpa [#allocation23], 0
    %34 = vsyncpa [#allocation26], 0
    %35 = vsyncpa [#allocation29], 0
    %36 = vsyncpa [#allocation32], 0
    %37 = vsyncpa [#allocation6], 0
    %s38 = scalar_lea.sflag [#allocation6], 1
    %39 = vsyncpa %s38, 0
    loop: start=0, step=1, limit=6
    $region2: #{tpu_custom_call.1} parent=1 // loop_pre_header
      _
    $region3: #{tpu_custom_call.1} parent=1 // loop_header
      %s41 = sphi 0, %s45
      %p42 = scmp.ge.s32.totalorder %s41, 6
      %s48 = sphi 0, %s60
      %s49 = sphi 0, %s56
      %s50 = sphi 0, %s48
      %s51 = sphi 0, %s49
      %s52 = sphi 0, %s50
      %s53 = sphi 0, %s51
      %s65 = sphi 0, %s67
      %s68 = sphi 0, %s65
      %s69 = sphi 0, %s68
      %s85 = sphi 0, %s69
      %s91 = sphi 0, %s93
      %s94 = sphi 0, %s91
      %s95 = sphi 0, %s94
      %s111 = sphi 0, %s95
      %s115 = sphi 0, %s115
      %s117 = sphi 0, %s115
      %s118 = sphi 0, %s117
      %s132 = sphi 0, %s118
      %s136 = sphi 0, %s136
      %s138 = sphi 0, %s136
      %s139 = sphi 0, %s138
      %s153 = sphi 0, %s139
      %s157 = sphi 0, %s157
      %s159 = sphi 0, %s157
      %s160 = sphi 0, %s159
      %s174 = sphi 0, %s160
      %s178 = sphi 0, %s178
      %s180 = sphi 0, %s178
      %s181 = sphi 0, %s180
      %s195 = sphi 0, %s181
      %s199 = sphi 0, %s199
      %s201 = sphi 0, %s199
      %s202 = sphi 0, %s201
      %s216 = sphi 0, %s202
      %s220 = sphi 0, %s220
      %s222 = sphi 0, %s220
      %s223 = sphi 0, %s222
      %s237 = sphi 0, %s223
      %s241 = sphi 0, %s241
      %s243 = sphi 0, %s241
      %s244 = sphi 0, %s243
      %s258 = sphi 0, %s244
      %s262 = sphi 0, %s262
      %s264 = sphi 0, %s262
      %s265 = sphi 0, %s264
      %s279 = sphi 0, %s265
      %s283 = sphi 0, %s283
      %s285 = sphi 0, %s283
      %s286 = sphi 0, %s285
      %s300 = sphi 0, %s286
      %s304 = sphi 0, %s304
      %s306 = sphi 0, %s304
      %s307 = sphi 0, %s306
      %s321 = sphi 0, %s307
      %s325 = sphi 0, %s325
      %s327 = sphi 0, %s325
      %s328 = sphi 0, %s327
      %s342 = sphi 0, %s328
      %s346 = sphi 0, %s346
      %s348 = sphi 0, %s346
      %s349 = sphi 0, %s348
      %s363 = sphi 0, %s349
      %s367 = sphi 0, %s367
      %s369 = sphi 0, %s367
      %s370 = sphi 0, %s369
      %s384 = sphi 0, %s370
      %s388 = sphi 0, %s388
      %s390 = sphi 0, %s388
      %s391 = sphi 0, %s390
      %s405 = sphi 0, %s391
      %s409 = sphi 0, %s409
      %s411 = sphi 0, %s409
      %s412 = sphi 0, %s411
      %s426 = sphi 0, %s412
      %s430 = sphi 0, %s430
      %s432 = sphi 0, %s430
      %s433 = sphi 0, %s432
      %s447 = sphi 0, %s433
      %s455 = sphi 0, %s457
      %s458 = sphi 0, %s455
      %s459 = sphi 0, %s458
      %s475 = sphi 0, %s459
    $region4: #{tpu_custom_call.1} parent=1 // loop_header_branch
      %44 = sbr.rel (%p42) target = $region8
    $region5: #{tpu_custom_call.1} parent=1 // loop_body
      %s46 = ssub.s32 %s41, 1
      %s47 = ssub.s32 %s41, 2
      %s54 = sadd.s32 1, %s49
      %p55 = scmp.ge.s32.totalorder %s54, 2
      %s56 = scalar_select %p55, 0, %s54
      %s57 = sadd.s32 1, %s48
      %s58 = scalar_select %p55, %s57, %s48
      %p59 = scmp.ge.s32.totalorder %s58, 2
      %s60 = scalar_select %p59, 0, %s58
      %s61 = ssub.s32 %s48, %s60
      %s62 = ssub.s32 %s49, %s56
      %s63 = sor.u32 %s61, %s62
      %p64 = scmp.eq.s32.totalorder %s63, 0
      %s66 = sadd.s32 %s65, 1
      %s67 = scalar_select %p64, %s65, %s66
      %p70 = pneg %p64
      %p71 = scmp.eq.s32.totalorder %s41, 3
      %p72 = por %p70, %p71
      %p73 = scmp.ne.s32.totalorder %s65, %s68
      %p74 = scmp.eq.s32.totalorder %s41, 0
      %p75 = por %p73, %p74
      %p76 = scmp.ne.s32.totalorder %s65, %s68
      %p77 = scmp.eq.s32.totalorder %s46, 3
      %p78 = por %p76, %p77
      %p79 = scmp.ne.s32.totalorder %s68, %s69
      %p80 = scmp.eq.s32.totalorder %s46, 0
      %p81 = por %p79, %p80
      %p82 = scmp.ne.s32.totalorder %s68, %s69
      %p83 = scmp.eq.s32.totalorder %s47, 3
      %p84 = por %p82, %p83
      %p86 = scmp.ne.s32.totalorder %s69, %s85
      %p87 = scmp.eq.s32.totalorder %s47, 0
      %p88 = por %p86, %p87
      %s89 = ssub.s32 %s48, %s60
      %p90 = scmp.eq.s32.totalorder %s89, 0
      %s92 = sadd.s32 %s91, 1
      %s93 = scalar_select %p90, %s91, %s92
      %p96 = pneg %p90
      %p97 = scmp.eq.s32.totalorder %s41, 3
      %p98 = por %p96, %p97
      %p99 = scmp.ne.s32.totalorder %s91, %s94
      %p100 = scmp.eq.s32.totalorder %s41, 0
      %p101 = por %p99, %p100
      %p102 = scmp.ne.s32.totalorder %s91, %s94
      %p103 = scmp.eq.s32.totalorder %s46, 3
      %p104 = por %p102, %p103
      %p105 = scmp.ne.s32.totalorder %s94, %s95
      %p106 = scmp.eq.s32.totalorder %s46, 0
      %p107 = por %p105, %p106
      %p108 = scmp.ne.s32.totalorder %s94, %s95
      %p109 = scmp.eq.s32.totalorder %s47, 3
      %p110 = por %p108, %p109
      %p112 = scmp.ne.s32.totalorder %s95, %s111
      %p113 = scmp.eq.s32.totalorder %s47, 0
      %p114 = por %p112, %p113
      %s116 = sadd.s32 %s115, 1
      %p119 = scmp.eq.s32.totalorder %s41, 3
      %p120 = scmp.ne.s32.totalorder %s115, %s117
      %p121 = scmp.eq.s32.totalorder %s41, 0
      %p122 = por %p120, %p121
      %p123 = scmp.ne.s32.totalorder %s115, %s117
      %p124 = scmp.eq.s32.totalorder %s46, 3
      %p125 = por %p123, %p124
      %p126 = scmp.ne.s32.totalorder %s117, %s118
      %p127 = scmp.eq.s32.totalorder %s46, 0
      %p128 = por %p126, %p127
      %p129 = scmp.ne.s32.totalorder %s117, %s118
      %p130 = scmp.eq.s32.totalorder %s47, 3
      %p131 = por %p129, %p130
      %p133 = scmp.ne.s32.totalorder %s118, %s132
      %p134 = scmp.eq.s32.totalorder %s47, 0
      %p135 = por %p133, %p134
      %s137 = sadd.s32 %s136, 1
      %p140 = scmp.eq.s32.totalorder %s41, 3
      %p141 = scmp.ne.s32.totalorder %s136, %s138
      %p142 = scmp.eq.s32.totalorder %s41, 0
      %p143 = por %p141, %p142
      %p144 = scmp.ne.s32.totalorder %s136, %s138
      %p145 = scmp.eq.s32.totalorder %s46, 3
      %p146 = por %p144, %p145
      %p147 = scmp.ne.s32.totalorder %s138, %s139
      %p148 = scmp.eq.s32.totalorder %s46, 0
      %p149 = por %p147, %p148
      %p150 = scmp.ne.s32.totalorder %s138, %s139
      %p151 = scmp.eq.s32.totalorder %s47, 3
      %p152 = por %p150, %p151
      %p154 = scmp.ne.s32.totalorder %s139, %s153
      %p155 = scmp.eq.s32.totalorder %s47, 0
      %p156 = por %p154, %p155
      %s158 = sadd.s32 %s157, 1
      %p161 = scmp.eq.s32.totalorder %s41, 3
      %p162 = scmp.ne.s32.totalorder %s157, %s159
      %p163 = scmp.eq.s32.totalorder %s41, 0
      %p164 = por %p162, %p163
      %p165 = scmp.ne.s32.totalorder %s157, %s159
      %p166 = scmp.eq.s32.totalorder %s46, 3
      %p167 = por %p165, %p166
      %p168 = scmp.ne.s32.totalorder %s159, %s160
      %p169 = scmp.eq.s32.totalorder %s46, 0
      %p170 = por %p168, %p169
      %p171 = scmp.ne.s32.totalorder %s159, %s160
      %p172 = scmp.eq.s32.totalorder %s47, 3
      %p173 = por %p171, %p172
      %p175 = scmp.ne.s32.totalorder %s160, %s174
      %p176 = scmp.eq.s32.totalorder %s47, 0
      %p177 = por %p175, %p176
      %s179 = sadd.s32 %s178, 1
      %p182 = scmp.eq.s32.totalorder %s41, 3
      %p183 = scmp.ne.s32.totalorder %s178, %s180
      %p184 = scmp.eq.s32.totalorder %s41, 0
      %p185 = por %p183, %p184
      %p186 = scmp.ne.s32.totalorder %s178, %s180
      %p187 = scmp.eq.s32.totalorder %s46, 3
      %p188 = por %p186, %p187
      %p189 = scmp.ne.s32.totalorder %s180, %s181
      %p190 = scmp.eq.s32.totalorder %s46, 0
      %p191 = por %p189, %p190
      %p192 = scmp.ne.s32.totalorder %s180, %s181
      %p193 = scmp.eq.s32.totalorder %s47, 3
      %p194 = por %p192, %p193
      %p196 = scmp.ne.s32.totalorder %s181, %s195
      %p197 = scmp.eq.s32.totalorder %s47, 0
      %p198 = por %p196, %p197
      %s200 = sadd.s32 %s199, 1
      %p203 = scmp.eq.s32.totalorder %s41, 3
      %p204 = scmp.ne.s32.totalorder %s199, %s201
      %p205 = scmp.eq.s32.totalorder %s41, 0
      %p206 = por %p204, %p205
      %p207 = scmp.ne.s32.totalorder %s199, %s201
      %p208 = scmp.eq.s32.totalorder %s46, 3
      %p209 = por %p207, %p208
      %p210 = scmp.ne.s32.totalorder %s201, %s202
      %p211 = scmp.eq.s32.totalorder %s46, 0
      %p212 = por %p210, %p211
      %p213 = scmp.ne.s32.totalorder %s201, %s202
      %p214 = scmp.eq.s32.totalorder %s47, 3
      %p215 = por %p213, %p214
      %p217 = scmp.ne.s32.totalorder %s202, %s216
      %p218 = scmp.eq.s32.totalorder %s47, 0
      %p219 = por %p217, %p218
      %s221 = sadd.s32 %s220, 1
      %p224 = scmp.eq.s32.totalorder %s41, 3
      %p225 = scmp.ne.s32.totalorder %s220, %s222
      %p226 = scmp.eq.s32.totalorder %s41, 0
      %p227 = por %p225, %p226
      %p228 = scmp.ne.s32.totalorder %s220, %s222
      %p229 = scmp.eq.s32.totalorder %s46, 3
      %p230 = por %p228, %p229
      %p231 = scmp.ne.s32.totalorder %s222, %s223
      %p232 = scmp.eq.s32.totalorder %s46, 0
      %p233 = por %p231, %p232
      %p234 = scmp.ne.s32.totalorder %s222, %s223
      %p235 = scmp.eq.s32.totalorder %s47, 3
      %p236 = por %p234, %p235
      %p238 = scmp.ne.s32.totalorder %s223, %s237
      %p239 = scmp.eq.s32.totalorder %s47, 0
      %p240 = por %p238, %p239
      %s242 = sadd.s32 %s241, 1
      %p245 = scmp.eq.s32.totalorder %s41, 3
      %p246 = scmp.ne.s32.totalorder %s241, %s243
      %p247 = scmp.eq.s32.totalorder %s41, 0
      %p248 = por %p246, %p247
      %p249 = scmp.ne.s32.totalorder %s241, %s243
      %p250 = scmp.eq.s32.totalorder %s46, 3
      %p251 = por %p249, %p250
      %p252 = scmp.ne.s32.totalorder %s243, %s244
      %p253 = scmp.eq.s32.totalorder %s46, 0
      %p254 = por %p252, %p253
      %p255 = scmp.ne.s32.totalorder %s243, %s244
      %p256 = scmp.eq.s32.totalorder %s47, 3
      %p257 = por %p255, %p256
      %p259 = scmp.ne.s32.totalorder %s244, %s258
      %p260 = scmp.eq.s32.totalorder %s47, 0
      %p261 = por %p259, %p260
      %s263 = sadd.s32 %s262, 1
      %p266 = scmp.eq.s32.totalorder %s41, 3
      %p267 = scmp.ne.s32.totalorder %s262, %s264
      %p268 = scmp.eq.s32.totalorder %s41, 0
      %p269 = por %p267, %p268
      %p270 = scmp.ne.s32.totalorder %s262, %s264
      %p271 = scmp.eq.s32.totalorder %s46, 3
      %p272 = por %p270, %p271
      %p273 = scmp.ne.s32.totalorder %s264, %s265
      %p274 = scmp.eq.s32.totalorder %s46, 0
      %p275 = por %p273, %p274
      %p276 = scmp.ne.s32.totalorder %s264, %s265
      %p277 = scmp.eq.s32.totalorder %s47, 3
      %p278 = por %p276, %p277
      %p280 = scmp.ne.s32.totalorder %s265, %s279
      %p281 = scmp.eq.s32.totalorder %s47, 0
      %p282 = por %p280, %p281
      %s284 = sadd.s32 %s283, 1
      %p287 = scmp.eq.s32.totalorder %s41, 3
      %p288 = scmp.ne.s32.totalorder %s283, %s285
      %p289 = scmp.eq.s32.totalorder %s41, 0
      %p290 = por %p288, %p289
      %p291 = scmp.ne.s32.totalorder %s283, %s285
      %p292 = scmp.eq.s32.totalorder %s46, 3
      %p293 = por %p291, %p292
      %p294 = scmp.ne.s32.totalorder %s285, %s286
      %p295 = scmp.eq.s32.totalorder %s46, 0
      %p296 = por %p294, %p295
      %p297 = scmp.ne.s32.totalorder %s285, %s286
      %p298 = scmp.eq.s32.totalorder %s47, 3
      %p299 = por %p297, %p298
      %p301 = scmp.ne.s32.totalorder %s286, %s300
      %p302 = scmp.eq.s32.totalorder %s47, 0
      %p303 = por %p301, %p302
      %s305 = sadd.s32 %s304, 1
      %p308 = scmp.eq.s32.totalorder %s41, 3
      %p309 = scmp.ne.s32.totalorder %s304, %s306
      %p310 = scmp.eq.s32.totalorder %s41, 0
      %p311 = por %p309, %p310
      %p312 = scmp.ne.s32.totalorder %s304, %s306
      %p313 = scmp.eq.s32.totalorder %s46, 3
      %p314 = por %p312, %p313
      %p315 = scmp.ne.s32.totalorder %s306, %s307
      %p316 = scmp.eq.s32.totalorder %s46, 0
      %p317 = por %p315, %p316
      %p318 = scmp.ne.s32.totalorder %s306, %s307
      %p319 = scmp.eq.s32.totalorder %s47, 3
      %p320 = por %p318, %p319
      %p322 = scmp.ne.s32.totalorder %s307, %s321
      %p323 = scmp.eq.s32.totalorder %s47, 0
      %p324 = por %p322, %p323
      %s326 = sadd.s32 %s325, 1
      %p329 = scmp.eq.s32.totalorder %s41, 3
      %p330 = scmp.ne.s32.totalorder %s325, %s327
      %p331 = scmp.eq.s32.totalorder %s41, 0
      %p332 = por %p330, %p331
      %p333 = scmp.ne.s32.totalorder %s325, %s327
      %p334 = scmp.eq.s32.totalorder %s46, 3
      %p335 = por %p333, %p334
      %p336 = scmp.ne.s32.totalorder %s327, %s328
      %p337 = scmp.eq.s32.totalorder %s46, 0
      %p338 = por %p336, %p337
      %p339 = scmp.ne.s32.totalorder %s327, %s328
      %p340 = scmp.eq.s32.totalorder %s47, 3
      %p341 = por %p339, %p340
      %p343 = scmp.ne.s32.totalorder %s328, %s342
      %p344 = scmp.eq.s32.totalorder %s47, 0
      %p345 = por %p343, %p344
      %s347 = sadd.s32 %s346, 1
      %p350 = scmp.eq.s32.totalorder %s41, 3
      %p351 = scmp.ne.s32.totalorder %s346, %s348
      %p352 = scmp.eq.s32.totalorder %s41, 0
      %p353 = por %p351, %p352
      %p354 = scmp.ne.s32.totalorder %s346, %s348
      %p355 = scmp.eq.s32.totalorder %s46, 3
      %p356 = por %p354, %p355
      %p357 = scmp.ne.s32.totalorder %s348, %s349
      %p358 = scmp.eq.s32.totalorder %s46, 0
      %p359 = por %p357, %p358
      %p360 = scmp.ne.s32.totalorder %s348, %s349
      %p361 = scmp.eq.s32.totalorder %s47, 3
      %p362 = por %p360, %p361
      %p364 = scmp.ne.s32.totalorder %s349, %s363
      %p365 = scmp.eq.s32.totalorder %s47, 0
      %p366 = por %p364, %p365
      %s368 = sadd.s32 %s367, 1
      %p371 = scmp.eq.s32.totalorder %s41, 3
      %p372 = scmp.ne.s32.totalorder %s367, %s369
      %p373 = scmp.eq.s32.totalorder %s41, 0
      %p374 = por %p372, %p373
      %p375 = scmp.ne.s32.totalorder %s367, %s369
      %p376 = scmp.eq.s32.totalorder %s46, 3
      %p377 = por %p375, %p376
      %p378 = scmp.ne.s32.totalorder %s369, %s370
      %p379 = scmp.eq.s32.totalorder %s46, 0
      %p380 = por %p378, %p379
      %p381 = scmp.ne.s32.totalorder %s369, %s370
      %p382 = scmp.eq.s32.totalorder %s47, 3
      %p383 = por %p381, %p382
      %p385 = scmp.ne.s32.totalorder %s370, %s384
      %p386 = scmp.eq.s32.totalorder %s47, 0
      %p387 = por %p385, %p386
      %s389 = sadd.s32 %s388, 1
      %p392 = scmp.eq.s32.totalorder %s41, 3
      %p393 = scmp.ne.s32.totalorder %s388, %s390
      %p394 = scmp.eq.s32.totalorder %s41, 0
      %p395 = por %p393, %p394
      %p396 = scmp.ne.s32.totalorder %s388, %s390
      %p397 = scmp.eq.s32.totalorder %s46, 3
      %p398 = por %p396, %p397
      %p399 = scmp.ne.s32.totalorder %s390, %s391
      %p400 = scmp.eq.s32.totalorder %s46, 0
      %p401 = por %p399, %p400
      %p402 = scmp.ne.s32.totalorder %s390, %s391
      %p403 = scmp.eq.s32.totalorder %s47, 3
      %p404 = por %p402, %p403
      %p406 = scmp.ne.s32.totalorder %s391, %s405
      %p407 = scmp.eq.s32.totalorder %s47, 0
      %p408 = por %p406, %p407
      %s410 = sadd.s32 %s409, 1
      %p413 = scmp.eq.s32.totalorder %s41, 3
      %p414 = scmp.ne.s32.totalorder %s409, %s411
      %p415 = scmp.eq.s32.totalorder %s41, 0
      %p416 = por %p414, %p415
      %p417 = scmp.ne.s32.totalorder %s409, %s411
      %p418 = scmp.eq.s32.totalorder %s46, 3
      %p419 = por %p417, %p418
      %p420 = scmp.ne.s32.totalorder %s411, %s412
      %p421 = scmp.eq.s32.totalorder %s46, 0
      %p422 = por %p420, %p421
      %p423 = scmp.ne.s32.totalorder %s411, %s412
      %p424 = scmp.eq.s32.totalorder %s47, 3
      %p425 = por %p423, %p424
      %p427 = scmp.ne.s32.totalorder %s412, %s426
      %p428 = scmp.eq.s32.totalorder %s47, 0
      %p429 = por %p427, %p428
      %s431 = sadd.s32 %s430, 1
      %p434 = scmp.eq.s32.totalorder %s41, 3
      %p435 = scmp.ne.s32.totalorder %s430, %s432
      %p436 = scmp.eq.s32.totalorder %s41, 0
      %p437 = por %p435, %p436
      %p438 = scmp.ne.s32.totalorder %s430, %s432
      %p439 = scmp.eq.s32.totalorder %s46, 3
      %p440 = por %p438, %p439
      %p441 = scmp.ne.s32.totalorder %s432, %s433
      %p442 = scmp.eq.s32.totalorder %s46, 0
      %p443 = por %p441, %p442
      %p444 = scmp.ne.s32.totalorder %s432, %s433
      %p445 = scmp.eq.s32.totalorder %s47, 3
      %p446 = por %p444, %p445
      %p448 = scmp.ne.s32.totalorder %s433, %s447
      %p449 = scmp.eq.s32.totalorder %s47, 0
      %p450 = por %p448, %p449
      %s451 = ssub.s32 %s48, %s60
      %s452 = ssub.s32 %s49, %s56
      %s453 = sor.u32 %s451, %s452
      %p454 = scmp.eq.s32.totalorder %s453, 0
      %s456 = sadd.s32 %s455, 1
      %s457 = scalar_select %p454, %s455, %s456
      %p460 = pneg %p454
      %p461 = scmp.eq.s32.totalorder %s41, 3
      %p462 = por %p460, %p461
      %p463 = scmp.ne.s32.totalorder %s455, %s458
      %p464 = scmp.eq.s32.totalorder %s41, 0
      %p465 = por %p463, %p464
      %p466 = scmp.ne.s32.totalorder %s455, %s458
      %p467 = scmp.eq.s32.totalorder %s46, 3
      %p468 = por %p466, %p467
      %p469 = scmp.ne.s32.totalorder %s458, %s459
      %p470 = scmp.eq.s32.totalorder %s46, 0
      %p471 = por %p469, %p470
      %p472 = scmp.ne.s32.totalorder %s458, %s459
      %p473 = scmp.eq.s32.totalorder %s47, 3
      %p474 = por %p472, %p473
      %p476 = scmp.ne.s32.totalorder %s459, %s475
      %p477 = scmp.eq.s32.totalorder %s47, 0
      %p478 = por %p476, %p477
      %p479 = scmp.le.s32.totalorder 1, %s41
      %p480 = scmp.lt.s32.totalorder %s41, 5
      %p481 = pnand %p479, %p480
      %p482 = pneg %p481
      // Predicated region
      $region9: #{tpu_custom_call.1} parent=5 // pred_check
        _
      $region10: #{tpu_custom_call.1} parent=5 // pred_check_branch
        %484 = sbr.rel (%p481) target = $region12
      $region11: #{tpu_custom_call.1} parent=5 // pred_region
        %s485 = ssub.s32 %s41, 1
        // Predicated region
        $region13: #{tpu_custom_call.1} parent=11 // pred_check
          %p486 = pneg %p128
        $region14: #{tpu_custom_call.1} parent=11 // pred_check_branch
          %488 = sbr.rel (%p486) target = $region16
        $region15: #{tpu_custom_call.1} parent=11 // pred_region
          %s490 = ssub.s32 2048, 2048
          %491 = vsyncadd [#allocation8], %s490
          %s492 = sshll.u32 [#allocation9], 4
          %s493 = int_to_ptr.vmem [resolvable:$true] %s492
          %498 = dma.hbm_to_vmem [thread:$0]  %s2, 2048, %s493, [#allocation8], 128, 128, 8
        $region16: #{tpu_custom_call.1} parent=11 // pred_fallthru
          _
        // Predicated region
        $region17: #{tpu_custom_call.1} parent=11 // pred_check
          %p499 = pneg %p149
        $region18: #{tpu_custom_call.1} parent=11 // pred_check_branch
          %501 = sbr.rel (%p499) target = $region20
        $region19: #{tpu_custom_call.1} parent=11 // pred_region
          %s503 = ssub.s32 16, 16
          %504 = vsyncadd [#allocation11], %s503
          %s506 = sshll.u32 [#allocation10], 4
          %s507 = int_to_ptr.vmem [resolvable:$true] %s506
          %509 = dma.hbm_to_vmem [thread:$0]  %s3, 16, %s507, [#allocation11]
        $region20: #{tpu_custom_call.1} parent=11 // pred_fallthru
          _
        // Predicated region
        $region21: #{tpu_custom_call.1} parent=11 // pred_check
          %p510 = pneg %p170
        $region22: #{tpu_custom_call.1} parent=11 // pred_check_branch
          %512 = sbr.rel (%p510) target = $region24
        $region23: #{tpu_custom_call.1} parent=11 // pred_region
          %s514 = ssub.s32 2048, 2048
          %515 = vsyncadd [#allocation11], %s514
          %s516 = sshll.u32 [#allocation12], 4
          %s517 = int_to_ptr.vmem [resolvable:$true] %s516
          %522 = dma.hbm_to_vmem [thread:$0]  %s4, 2048, %s517, [#allocation11], 128, 128, 8
        $region24: #{tpu_custom_call.1} parent=11 // pred_fallthru
          _
        // Predicated region
        $region25: #{tpu_custom_call.1} parent=11 // pred_check
          %p523 = pneg %p191
        $region26: #{tpu_custom_call.1} parent=11 // pred_check_branch
          %525 = sbr.rel (%p523) target = $region28
        $region27: #{tpu_custom_call.1} parent=11 // pred_region
          %s527 = ssub.s32 16, 16
          %528 = vsyncadd [#allocation14], %s527
          %s530 = sshll.u32 [#allocation13], 4
          %s531 = int_to_ptr.vmem [resolvable:$true] %s530
          %533 = dma.hbm_to_vmem [thread:$0]  %s5, 16, %s531, [#allocation14]
        $region28: #{tpu_custom_call.1} parent=11 // pred_fallthru
          _
        // Predicated region
        $region29: #{tpu_custom_call.1} parent=11 // pred_check
          %p534 = pneg %p212
        $region30: #{tpu_custom_call.1} parent=11 // pred_check_branch
          %536 = sbr.rel (%p534) target = $region32
        $region31: #{tpu_custom_call.1} parent=11 // pred_region
          %s538 = ssub.s32 2048, 2048
          %539 = vsyncadd [#allocation14], %s538
          %s540 = sshll.u32 [#allocation15], 4
          %s541 = int_to_ptr.vmem [resolvable:$true] %s540
          %546 = dma.hbm_to_vmem [thread:$0]  %s6, 2048, %s541, [#allocation14], 128, 128, 8
        $region32: #{tpu_custom_call.1} parent=11 // pred_fallthru
          _
        // Predicated region
        $region33: #{tpu_custom_call.1} parent=11 // pred_check
          %p547 = pneg %p233
        $region34: #{tpu_custom_call.1} parent=11 // pred_check_branch
          %549 = sbr.rel (%p547) target = $region36
        $region35: #{tpu_custom_call.1} parent=11 // pred_region
          %s551 = ssub.s32 16, 16
          %552 = vsyncadd [#allocation17], %s551
          %s554 = sshll.u32 [#allocation16], 4
          %s555 = int_to_ptr.vmem [resolvable:$true] %s554
          %557 = dma.hbm_to_vmem [thread:$0]  %s7, 16, %s555, [#allocation17]
        $region36: #{tpu_custom_call.1} parent=11 // pred_fallthru
          _
        // Predicated region
        $region37: #{tpu_custom_call.1} parent=11 // pred_check
          %p558 = pneg %p254
        $region38: #{tpu_custom_call.1} parent=11 // pred_check_branch
          %560 = sbr.rel (%p558) target = $region40
        $region39: #{tpu_custom_call.1} parent=11 // pred_region
          %s562 = ssub.s32 2048, 2048
          %563 = vsyncadd [#allocation17], %s562
          %s564 = sshll.u32 [#allocation18], 4
          %s565 = int_to_ptr.vmem [resolvable:$true] %s564
          %570 = dma.hbm_to_vmem [thread:$0]  %s8, 2048, %s565, [#allocation17], 128, 128, 8
        $region40: #{tpu_custom_call.1} parent=11 // pred_fallthru
          _
        // Predicated region
        $region41: #{tpu_custom_call.1} parent=11 // pred_check
          %p571 = pneg %p275
        $region42: #{tpu_custom_call.1} parent=11 // pred_check_branch
          %573 = sbr.rel (%p571) target = $region44
        $region43: #{tpu_custom_call.1} parent=11 // pred_region
          %s575 = ssub.s32 16, 16
          %576 = vsyncadd [#allocation20], %s575
          %s578 = sshll.u32 [#allocation19], 4
          %s579 = int_to_ptr.vmem [resolvable:$true] %s578
          %581 = dma.hbm_to_vmem [thread:$0]  %s9, 16, %s579, [#allocation20]
        $region44: #{tpu_custom_call.1} parent=11 // pred_fallthru
          _
        // Predicated region
        $region45: #{tpu_custom_call.1} parent=11 // pred_check
          %p582 = pneg %p296
        $region46: #{tpu_custom_call.1} parent=11 // pred_check_branch
          %584 = sbr.rel (%p582) target = $region48
        $region47: #{tpu_custom_call.1} parent=11 // pred_region
          %s586 = ssub.s32 4096, 4096
          %587 = vsyncadd [#allocation20], %s586
          %s588 = sshll.u32 [#allocation21], 4
          %s589 = int_to_ptr.vmem [resolvable:$true] %s588
          %594 = dma.hbm_to_vmem [thread:$0]  %s10, 4096, %s589, [#allocation20], 256, 256, 16
        $region48: #{tpu_custom_call.1} parent=11 // pred_fallthru
          _
        // Predicated region
        $region49: #{tpu_custom_call.1} parent=11 // pred_check
          %p595 = pneg %p317
        $region50: #{tpu_custom_call.1} parent=11 // pred_check_branch
          %597 = sbr.rel (%p595) target = $region52
        $region51: #{tpu_custom_call.1} parent=11 // pred_region
          %s599 = ssub.s32 32, 32
          %600 = vsyncadd [#allocation23], %s599
          %s602 = sshll.u32 [#allocation22], 4
          %s603 = int_to_ptr.vmem [resolvable:$true] %s602
          %605 = dma.hbm_to_vmem [thread:$0]  %s11, 32, %s603, [#allocation23]
        $region52: #{tpu_custom_call.1} parent=11 // pred_fallthru
          _
        // Predicated region
        $region53: #{tpu_custom_call.1} parent=11 // pred_check
          %p606 = pneg %p338
        $region54: #{tpu_custom_call.1} parent=11 // pred_check_branch
          %608 = sbr.rel (%p606) target = $region56
        $region55: #{tpu_custom_call.1} parent=11 // pred_region
          %s610 = ssub.s32 4096, 4096
          %611 = vsyncadd [#allocation23], %s610
          %s612 = sshll.u32 [#allocation24], 4
          %s613 = int_to_ptr.vmem [resolvable:$true] %s612
          %618 = dma.hbm_to_vmem [thread:$0]  %s12, 4096, %s613, [#allocation23], 128, 128, 8
        $region56: #{tpu_custom_call.1} parent=11 // pred_fallthru
          _
        // Predicated region
        $region57: #{tpu_custom_call.1} parent=11 // pred_check
          %p619 = pneg %p359
        $region58: #{tpu_custom_call.1} parent=11 // pred_check_branch
          %621 = sbr.rel (%p619) target = $region60
        $region59: #{tpu_custom_call.1} parent=11 // pred_region
          %s623 = ssub.s32 16, 16
          %624 = vsyncadd [#allocation26], %s623
          %s626 = sshll.u32 [#allocation25], 4
          %s627 = int_to_ptr.vmem [resolvable:$true] %s626
          %629 = dma.hbm_to_vmem [thread:$0]  %s13, 16, %s627, [#allocation26]
        $region60: #{tpu_custom_call.1} parent=11 // pred_fallthru
          _
        // Predicated region
        $region61: #{tpu_custom_call.1} parent=11 // pred_check
          %p630 = pneg %p380
        $region62: #{tpu_custom_call.1} parent=11 // pred_check_branch
          %632 = sbr.rel (%p630) target = $region64
        $region63: #{tpu_custom_call.1} parent=11 // pred_region
          %s634 = ssub.s32 16, 16
          %635 = vsyncadd [#allocation26], %s634
          %s637 = sshll.u32 [#allocation27], 4
          %s638 = int_to_ptr.vmem [resolvable:$true] %s637
          %640 = dma.hbm_to_vmem [thread:$0]  %s14, 16, %s638, [#allocation26]
        $region64: #{tpu_custom_call.1} parent=11 // pred_fallthru
          _
        // Predicated region
        $region65: #{tpu_custom_call.1} parent=11 // pred_check
          %p641 = pneg %p401
        $region66: #{tpu_custom_call.1} parent=11 // pred_check_branch
          %643 = sbr.rel (%p641) target = $region68
        $region67: #{tpu_custom_call.1} parent=11 // pred_region
          %s645 = ssub.s32 16, 16
          %646 = vsyncadd [#allocation29], %s645
          %s648 = sshll.u32 [#allocation28], 4
          %s649 = int_to_ptr.vmem [resolvable:$true] %s648
          %651 = dma.hbm_to_vmem [thread:$0]  %s15, 16, %s649, [#allocation29]
        $region68: #{tpu_custom_call.1} parent=11 // pred_fallthru
          _
        // Predicated region
        $region69: #{tpu_custom_call.1} parent=11 // pred_check
          %p652 = pneg %p422
        $region70: #{tpu_custom_call.1} parent=11 // pred_check_branch
          %654 = sbr.rel (%p652) target = $region72
        $region71: #{tpu_custom_call.1} parent=11 // pred_region
          %s656 = ssub.s32 16, 16
          %657 = vsyncadd [#allocation29], %s656
          %s659 = sshll.u32 [#allocation30], 4
          %s660 = int_to_ptr.vmem [resolvable:$true] %s659
          %662 = dma.hbm_to_vmem [thread:$0]  %s16, 16, %s660, [#allocation29]
        $region72: #{tpu_custom_call.1} parent=11 // pred_fallthru
          _
        // Predicated region
        $region73: #{tpu_custom_call.1} parent=11 // pred_check
          %p663 = pneg %p443
        $region74: #{tpu_custom_call.1} parent=11 // pred_check_branch
          %665 = sbr.rel (%p663) target = $region76
        $region75: #{tpu_custom_call.1} parent=11 // pred_region
          %s667 = ssub.s32 16, 16
          %668 = vsyncadd [#allocation32], %s667
          %s670 = sshll.u32 [#allocation31], 4
          %s671 = int_to_ptr.vmem [resolvable:$true] %s670
          %673 = dma.hbm_to_vmem [thread:$0]  %s17, 16, %s671, [#allocation32]
        $region76: #{tpu_custom_call.1} parent=11 // pred_fallthru
          _
      $region12: #{tpu_custom_call.1} parent=5 // pred_fallthru
        _
      %p674 = scmp.lt.s32.totalorder %s41, 4
      // Predicated region
      $region77: #{tpu_custom_call.1} parent=5 // pred_check
        %p675 = pneg %p674
      $region78: #{tpu_custom_call.1} parent=5 // pred_check_branch
        %677 = sbr.rel (%p675) target = $region80
      $region79: #{tpu_custom_call.1} parent=5 // pred_region
        // Predicated region
        $region81: #{tpu_custom_call.1} parent=79 // pred_check
          %p678 = pneg %p75
        $region82: #{tpu_custom_call.1} parent=79 // pred_check_branch
          %680 = sbr.rel (%p678) target = $region84
        $region83: #{tpu_custom_call.1} parent=79 // pred_region
          %s681 = sand.u32 %s65, 1
          %s682 = scalar_lea.sflag [#allocation5], %s681
          %s683 = sand.u32 %s65, 1
          %s684 = smul.addr %s683, 8
          %s685 = scalar_lea.vmem [#allocation4], %s684
          %s687 = ssub.s32 128, 128
          %688 = vsyncadd %s682, %s687
          %s689 = smul.addr %s48, 2
          %s690 = sadd.s32 %s49, %s689
          %s691 = smul.addr %s690, 128
          %s692 = scalar_lea.hbm %s0, %s691
          %s694 = sshll.u32 %s685, 4
          %s695 = int_to_ptr.vmem [resolvable:$true] %s694
          %697 = dma.hbm_to_vmem [thread:$0]  %s692, 128, %s695, %s682
        $region84: #{tpu_custom_call.1} parent=79 // pred_fallthru
          _
        // Predicated region
        $region85: #{tpu_custom_call.1} parent=79 // pred_check
          %p698 = pneg %p101
        $region86: #{tpu_custom_call.1} parent=79 // pred_check_branch
          %700 = sbr.rel (%p698) target = $region88
        $region87: #{tpu_custom_call.1} parent=79 // pred_region
          %s701 = sand.u32 %s41, 1
          %s702 = scalar_lea.sflag [#allocation8], %s701
          %s703 = sand.u32 %s91, 1
          %s704 = smul.addr %s703, 16
          %s705 = scalar_lea.vmem [#allocation7], %s704
          %s707 = ssub.s32 256, 256
          %708 = vsyncadd %s702, %s707
          %s709 = smul.addr %s48, 2
          %s710 = smul.addr %s709, 128
          %s711 = scalar_lea.hbm %s1, %s710
          %s712 = sshll.u32 %s705, 4
          %s713 = int_to_ptr.vmem [resolvable:$true] %s712
          %718 = dma.hbm_to_vmem [thread:$0]  %s711, 256, %s713, %s702, 128, 128, 8
        $region88: #{tpu_custom_call.1} parent=79 // pred_fallthru
          _
      $region80: #{tpu_custom_call.1} parent=5 // pred_fallthru
        _
      %p719 = scmp.le.s32.totalorder 1, %s41
      %p720 = scmp.lt.s32.totalorder %s41, 5
      %p721 = pnand %p719, %p720
      %p722 = pneg %p721
      // Predicated region
      $region89: #{tpu_custom_call.1} parent=5 // pred_check
        _
      $region90: #{tpu_custom_call.1} parent=5 // pred_check_branch
        %724 = sbr.rel (%p721) target = $region92
      $region91: #{tpu_custom_call.1} parent=5 // pred_region
        %s725 = ssub.s32 %s41, 1
        %s726 = sand.u32 %s68, 1
        %s727 = scalar_lea.sflag [#allocation5], %s726
        %s728 = sand.u32 %s68, 1
        %s729 = smul.addr %s728, 8
        %s730 = scalar_lea.vmem [#allocation4], %s729
        // Predicated region
        $region93: #{tpu_custom_call.1} parent=91 // pred_check
          %p731 = pneg %p81
        $region94: #{tpu_custom_call.1} parent=91 // pred_check_branch
          %733 = sbr.rel (%p731) target = $region96
        $region95: #{tpu_custom_call.1} parent=91 // pred_region
          %734 = dma.done %s727, 128
        $region96: #{tpu_custom_call.1} parent=91 // pred_fallthru
          _
        %s735 = sand.u32 %s46, 1
        %s736 = scalar_lea.sflag [#allocation8], %s735
        %s737 = sand.u32 %s94, 1
        %s738 = smul.addr %s737, 16
        %s739 = scalar_lea.vmem [#allocation7], %s738
        // Predicated region
        $region97: #{tpu_custom_call.1} parent=91 // pred_check
          %p740 = pneg %p107
        $region98: #{tpu_custom_call.1} parent=91 // pred_check_branch
          %742 = sbr.rel (%p740) target = $region100
        $region99: #{tpu_custom_call.1} parent=91 // pred_region
          %743 = dma.done %s736, 256
        $region100: #{tpu_custom_call.1} parent=91 // pred_fallthru
          _
        // Predicated region
        $region101: #{tpu_custom_call.1} parent=91 // pred_check
          %p744 = pneg %p128
        $region102: #{tpu_custom_call.1} parent=91 // pred_check_branch
          %746 = sbr.rel (%p744) target = $region104
        $region103: #{tpu_custom_call.1} parent=91 // pred_region
          %747 = dma.done [#allocation8], 2048
        $region104: #{tpu_custom_call.1} parent=91 // pred_fallthru
          _
        // Predicated region
        $region105: #{tpu_custom_call.1} parent=91 // pred_check
          %p748 = pneg %p149
        $region106: #{tpu_custom_call.1} parent=91 // pred_check_branch
          %750 = sbr.rel (%p748) target = $region108
        $region107: #{tpu_custom_call.1} parent=91 // pred_region
          %751 = dma.done [#allocation11], 16
        $region108: #{tpu_custom_call.1} parent=91 // pred_fallthru
          _
        // Predicated region
        $region109: #{tpu_custom_call.1} parent=91 // pred_check
          %p752 = pneg %p170
        $region110: #{tpu_custom_call.1} parent=91 // pred_check_branch
          %754 = sbr.rel (%p752) target = $region112
        $region111: #{tpu_custom_call.1} parent=91 // pred_region
          %755 = dma.done [#allocation11], 2048
        $region112: #{tpu_custom_call.1} parent=91 // pred_fallthru
          _
        // Predicated region
        $region113: #{tpu_custom_call.1} parent=91 // pred_check
          %p756 = pneg %p191
        $region114: #{tpu_custom_call.1} parent=91 // pred_check_branch
          %758 = sbr.rel (%p756) target = $region116
        $region115: #{tpu_custom_call.1} parent=91 // pred_region
          %759 = dma.done [#allocation14], 16
        $region116: #{tpu_custom_call.1} parent=91 // pred_fallthru
          _
        // Predicated region
        $region117: #{tpu_custom_call.1} parent=91 // pred_check
          %p760 = pneg %p212
        $region118: #{tpu_custom_call.1} parent=91 // pred_check_branch
          %762 = sbr.rel (%p760) target = $region120
        $region119: #{tpu_custom_call.1} parent=91 // pred_region
          %763 = dma.done [#allocation14], 2048
        $region120: #{tpu_custom_call.1} parent=91 // pred_fallthru
          _
        // Predicated region
        $region121: #{tpu_custom_call.1} parent=91 // pred_check
          %p764 = pneg %p233
        $region122: #{tpu_custom_call.1} parent=91 // pred_check_branch
          %766 = sbr.rel (%p764) target = $region124
        $region123: #{tpu_custom_call.1} parent=91 // pred_region
          %767 = dma.done [#allocation17], 16
        $region124: #{tpu_custom_call.1} parent=91 // pred_fallthru
          _
        // Predicated region
        $region125: #{tpu_custom_call.1} parent=91 // pred_check
          %p768 = pneg %p254
        $region126: #{tpu_custom_call.1} parent=91 // pred_check_branch
          %770 = sbr.rel (%p768) target = $region128
        $region127: #{tpu_custom_call.1} parent=91 // pred_region
          %771 = dma.done [#allocation17], 2048
        $region128: #{tpu_custom_call.1} parent=91 // pred_fallthru
          _
        // Predicated region
        $region129: #{tpu_custom_call.1} parent=91 // pred_check
          %p772 = pneg %p275
        $region130: #{tpu_custom_call.1} parent=91 // pred_check_branch
          %774 = sbr.rel (%p772) target = $region132
        $region131: #{tpu_custom_call.1} parent=91 // pred_region
          %775 = dma.done [#allocation20], 16
        $region132: #{tpu_custom_call.1} parent=91 // pred_fallthru
          _
        // Predicated region
        $region133: #{tpu_custom_call.1} parent=91 // pred_check
          %p776 = pneg %p296
        $region134: #{tpu_custom_call.1} parent=91 // pred_check_branch
          %778 = sbr.rel (%p776) target = $region136
        $region135: #{tpu_custom_call.1} parent=91 // pred_region
          %779 = dma.done [#allocation20], 4096
        $region136: #{tpu_custom_call.1} parent=91 // pred_fallthru
          _
        // Predicated region
        $region137: #{tpu_custom_call.1} parent=91 // pred_check
          %p780 = pneg %p317
        $region138: #{tpu_custom_call.1} parent=91 // pred_check_branch
          %782 = sbr.rel (%p780) target = $region140
        $region139: #{tpu_custom_call.1} parent=91 // pred_region
          %783 = dma.done [#allocation23], 32
        $region140: #{tpu_custom_call.1} parent=91 // pred_fallthru
          _
        // Predicated region
        $region141: #{tpu_custom_call.1} parent=91 // pred_check
          %p784 = pneg %p338
        $region142: #{tpu_custom_call.1} parent=91 // pred_check_branch
          %786 = sbr.rel (%p784) target = $region144
        $region143: #{tpu_custom_call.1} parent=91 // pred_region
          %787 = dma.done [#allocation23], 4096
        $region144: #{tpu_custom_call.1} parent=91 // pred_fallthru
          _
        // Predicated region
        $region145: #{tpu_custom_call.1} parent=91 // pred_check
          %p788 = pneg %p359
        $region146: #{tpu_custom_call.1} parent=91 // pred_check_branch
          %790 = sbr.rel (%p788) target = $region148
        $region147: #{tpu_custom_call.1} parent=91 // pred_region
          %791 = dma.done [#allocation26], 16
        $region148: #{tpu_custom_call.1} parent=91 // pred_fallthru
          _
        // Predicated region
        $region149: #{tpu_custom_call.1} parent=91 // pred_check
          %p792 = pneg %p380
        $region150: #{tpu_custom_call.1} parent=91 // pred_check_branch
          %794 = sbr.rel (%p792) target = $region152
        $region151: #{tpu_custom_call.1} parent=91 // pred_region
          %795 = dma.done [#allocation26], 16
        $region152: #{tpu_custom_call.1} parent=91 // pred_fallthru
          _
        // Predicated region
        $region153: #{tpu_custom_call.1} parent=91 // pred_check
          %p796 = pneg %p401
        $region154: #{tpu_custom_call.1} parent=91 // pred_check_branch
          %798 = sbr.rel (%p796) target = $region156
        $region155: #{tpu_custom_call.1} parent=91 // pred_region
          %799 = dma.done [#allocation29], 16
        $region156: #{tpu_custom_call.1} parent=91 // pred_fallthru
          _
        // Predicated region
        $region157: #{tpu_custom_call.1} parent=91 // pred_check
          %p800 = pneg %p422
        $region158: #{tpu_custom_call.1} parent=91 // pred_check_branch
          %802 = sbr.rel (%p800) target = $region160
        $region159: #{tpu_custom_call.1} parent=91 // pred_region
          %803 = dma.done [#allocation29], 16
        $region160: #{tpu_custom_call.1} parent=91 // pred_fallthru
          _
        // Predicated region
        $region161: #{tpu_custom_call.1} parent=91 // pred_check
          %p804 = pneg %p443
        $region162: #{tpu_custom_call.1} parent=91 // pred_check_branch
          %806 = sbr.rel (%p804) target = $region164
        $region163: #{tpu_custom_call.1} parent=91 // pred_region
          %807 = dma.done [#allocation32], 16
        $region164: #{tpu_custom_call.1} parent=91 // pred_fallthru
          _
        %s808 = sand.u32 %s68, 1
        %s809 = scalar_lea.sflag [#allocation5], %s808
        %s810 = sand.u32 %s68, 1
        %s811 = smul.addr %s810, 8
        %s812 = scalar_lea.vmem [#allocation4], %s811
        %p813 = pneg %p81
        %p814 = pneg %p78
        %s815 = sand.u32 %s46, 1
        %s816 = scalar_lea.sflag [#allocation8], %s815
        %s817 = sand.u32 %s94, 1
        %s818 = smul.addr %s817, 16
        %s819 = scalar_lea.vmem [#allocation7], %s818
        %p820 = pneg %p107
        %p821 = pneg %p104
        %p822 = pneg %p128
        %p823 = pneg %p125
        %p824 = pneg %p149
        %p825 = pneg %p146
        %p826 = pneg %p170
        %p827 = pneg %p167
        %p828 = pneg %p191
        %p829 = pneg %p188
        %p830 = pneg %p212
        %p831 = pneg %p209
        %p832 = pneg %p233
        %p833 = pneg %p230
        %p834 = pneg %p254
        %p835 = pneg %p251
        %p836 = pneg %p275
        %p837 = pneg %p272
        %p838 = pneg %p296
        %p839 = pneg %p293
        %p840 = pneg %p317
        %p841 = pneg %p314
        %p842 = pneg %p338
        %p843 = pneg %p335
        %p844 = pneg %p359
        %p845 = pneg %p356
        %p846 = pneg %p380
        %p847 = pneg %p377
        %p848 = pneg %p401
        %p849 = pneg %p398
        %p850 = pneg %p422
        %p851 = pneg %p419
        %p852 = pneg %p443
        %p853 = pneg %p440
        %p854 = pneg %p471
        %p855 = pneg %p468
        %s856 = sand.u32 %s458, 1
        %s857 = scalar_lea.sflag [#allocation6], %s856
        %s858 = sand.u32 %s458, 1
        %s859 = smul.addr %s858, 8
        %s860 = scalar_lea.vmem [#allocation33], %s859
        %p861 = scmp.eq.s32.totalorder %s51, 0
        // Predicated region
        $region165: #{tpu_custom_call.1} parent=91 // pred_check
          %p862 = pneg %p861
        $region166: #{tpu_custom_call.1} parent=91 // pred_check_branch
          %864 = sbr.rel (%p862) target = $region168
        $region167: #{tpu_custom_call.1} parent=91 // pred_region
          %v865 = vld [vmem:[%s739] sm:$0xff]
          %v866 = vld [vmem:[%s739 + $0x8] sm:$0xff]
          %v867 = vld [vmem:[#allocation12] sm:$0xff]
          %v868 = vld [vmem:[#allocation12 + $0x8] sm:$0xff]
          %v869 = vld [vmem:[#allocation12 + $0x10] sm:$0xff]
          %v870 = vld [vmem:[#allocation12 + $0x18] sm:$0xff]
          %v871 = vld [vmem:[#allocation12 + $0x20] sm:$0xff]
          %v872 = vld [vmem:[#allocation12 + $0x28] sm:$0xff]
          %v873 = vld [vmem:[#allocation12 + $0x30] sm:$0xff]
          %v874 = vld [vmem:[#allocation12 + $0x38] sm:$0xff]
          %v875 = vld [vmem:[#allocation12 + $0x40] sm:$0xff]
          %v876 = vld [vmem:[#allocation12 + $0x48] sm:$0xff]
          %v877 = vld [vmem:[#allocation12 + $0x50] sm:$0xff]
          %v878 = vld [vmem:[#allocation12 + $0x58] sm:$0xff]
          %v879 = vld [vmem:[#allocation12 + $0x60] sm:$0xff]
          %v880 = vld [vmem:[#allocation12 + $0x68] sm:$0xff]
          %v881 = vld [vmem:[#allocation12 + $0x70] sm:$0xff]
          %v882 = vld [vmem:[#allocation12 + $0x78] sm:$0xff]
          %v883 = vld [vmem:[#allocation13] sm:$0x1]
          %v885 = vlaneseq
          %v886 = vshrl.u32 %v885, 7
          %v887 = vsub.s32 0, %v886
          %v888 = vrot.slane %v883, %v887
          %890 = vmatprep.subr.mxu0 0.0
          %891 = vmatpush1.msra.mxu0 %v867
          %892 = vmatprep.subr.mxu0 0.0
          %893 = vmatpush1.msra.mxu0 %v868
          %894 = vmatprep.subr.mxu0 0.0
          %895 = vmatpush1.msra.mxu0 %v869
          %896 = vmatprep.subr.mxu0 0.0
          %897 = vmatpush1.msra.mxu0 %v870
          %898 = vmatprep.subr.mxu0 0.0
          %899 = vmatpush1.msra.mxu0 %v871
          %900 = vmatprep.subr.mxu0 0.0
          %901 = vmatpush1.msra.mxu0 %v872
          %902 = vmatprep.subr.mxu0 0.0
          %903 = vmatpush1.msra.mxu0 %v873
          %904 = vmatprep.subr.mxu0 0.0
          %905 = vmatpush1.msra.mxu0 %v874
          %906 = vmatprep.subr.mxu0 0.0
          %907 = vmatpush1.msra.mxu0 %v875
          %908 = vmatprep.subr.mxu0 0.0
          %909 = vmatpush1.msra.mxu0 %v876
          %910 = vmatprep.subr.mxu0 0.0
          %911 = vmatpush1.msra.mxu0 %v877
          %912 = vmatprep.subr.mxu0 0.0
          %913 = vmatpush1.msra.mxu0 %v878
          %914 = vmatprep.subr.mxu0 0.0
          %915 = vmatpush1.msra.mxu0 %v879
          %916 = vmatprep.subr.mxu0 0.0
          %917 = vmatpush1.msra.mxu0 %v880
          %918 = vmatprep.subr.mxu0 0.0
          %919 = vmatpush1.msra.mxu0 %v881
          %920 = vmatprep.subr.mxu0 0.0
          %921 = vmatpush1.msra.mxu0 %v882
          %922 = vmatprep.subr.mxu0 0.0
          %923 = vmatpush1.msra.mxu0 0.0
          %924 = vmatprep.subr.mxu0 0.0
          %925 = vmatpush1.msra.mxu0 0.0
          %926 = vmatprep.subr.mxu0 0.0
          %927 = vmatpush1.msra.mxu0 0.0
          %928 = vmatprep.subr.mxu0 0.0
          %929 = vmatpush1.msra.mxu0 0.0
          %930 = vmatprep.subr.mxu0 0.0
          %931 = vmatpush1.msra.mxu0 0.0
          %932 = vmatprep.subr.mxu0 0.0
          %933 = vmatpush1.msra.mxu0 0.0
          %934 = vmatprep.subr.mxu0 0.0
          %935 = vmatpush1.msra.mxu0 0.0
          %936 = vmatprep.subr.mxu0 0.0
          %937 = vmatpush1.msra.mxu0 0.0
          %938 = vmatprep.subr.mxu0 0.0
          %939 = vmatpush1.msra.mxu0 0.0
          %940 = vmatprep.subr.mxu0 0.0
          %941 = vmatpush1.msra.mxu0 0.0
          %942 = vmatprep.subr.mxu0 0.0
          %943 = vmatpush1.msra.mxu0 0.0
          %944 = vmatprep.subr.mxu0 0.0
          %945 = vmatpush1.msra.mxu0 0.0
          %946 = vmatprep.subr.mxu0 0.0
          %947 = vmatpush1.msra.mxu0 0.0
          %948 = vmatprep.subr.mxu0 0.0
          %949 = vmatpush1.msra.mxu0 0.0
          %950 = vmatprep.subr.mxu0 0.0
          %951 = vmatpush1.msra.mxu0 0.0
          %952 = vmatprep.subr.mxu0 0.0
          %953 = vmatpush1.msra.mxu0 0.0
          %954 = vmatprep.mubr.f32.mxu0 0.0
          %955 = vmatmul.mubr.f32.gmra.mrb[0].mxu0 %v865
          %v956 = vpop.f32.mrb[0].mxu0
          %v957 = vadd.f32 %v888, %v956
          %v958 = vpop.f32.mrb[0].mxu0
          %959 = vmatprep.mubr.f32.mxu0 0.0
          %960 = vmatmul.mubr.f32.gmra.mrb[0].mxu0 %v866
          %v961 = vpop.f32.mrb[0].mxu0
          %v962 = vadd.f32 %v888, %v961
          %v963 = vpop.f32.mrb[0].mxu0
          %964 = vdwg.mxu0
          %v965 = vld [vmem:[#allocation15] sm:$0xff]
          %v966 = vld [vmem:[#allocation15 + $0x8] sm:$0xff]
          %v967 = vld [vmem:[#allocation15 + $0x10] sm:$0xff]
          %v968 = vld [vmem:[#allocation15 + $0x18] sm:$0xff]
          %v969 = vld [vmem:[#allocation15 + $0x20] sm:$0xff]
          %v970 = vld [vmem:[#allocation15 + $0x28] sm:$0xff]
          %v971 = vld [vmem:[#allocation15 + $0x30] sm:$0xff]
          %v972 = vld [vmem:[#allocation15 + $0x38] sm:$0xff]
          %v973 = vld [vmem:[#allocation15 + $0x40] sm:$0xff]
          %v974 = vld [vmem:[#allocation15 + $0x48] sm:$0xff]
          %v975 = vld [vmem:[#allocation15 + $0x50] sm:$0xff]
          %v976 = vld [vmem:[#allocation15 + $0x58] sm:$0xff]
          %v977 = vld [vmem:[#allocation15 + $0x60] sm:$0xff]
          %v978 = vld [vmem:[#allocation15 + $0x68] sm:$0xff]
          %v979 = vld [vmem:[#allocation15 + $0x70] sm:$0xff]
          %v980 = vld [vmem:[#allocation15 + $0x78] sm:$0xff]
          %v981 = vld [vmem:[#allocation16] sm:$0x1]
          %v983 = vlaneseq
          %v984 = vshrl.u32 %v983, 7
          %v985 = vsub.s32 0, %v984
          %v986 = vrot.slane %v981, %v985
          %988 = vmatprep.subr.mxu0 0.0
          %989 = vmatpush1.msra.mxu0 %v965
          %990 = vmatprep.subr.mxu0 0.0
          %991 = vmatpush1.msra.mxu0 %v966
          %992 = vmatprep.subr.mxu0 0.0
          %993 = vmatpush1.msra.mxu0 %v967
          %994 = vmatprep.subr.mxu0 0.0
          %995 = vmatpush1.msra.mxu0 %v968
          %996 = vmatprep.subr.mxu0 0.0
          %997 = vmatpush1.msra.mxu0 %v969
          %998 = vmatprep.subr.mxu0 0.0
          %999 = vmatpush1.msra.mxu0 %v970
          %1000 = vmatprep.subr.mxu0 0.0
          %1001 = vmatpush1.msra.mxu0 %v971
          %1002 = vmatprep.subr.mxu0 0.0
          %1003 = vmatpush1.msra.mxu0 %v972
          %1004 = vmatprep.subr.mxu0 0.0
          %1005 = vmatpush1.msra.mxu0 %v973
          %1006 = vmatprep.subr.mxu0 0.0
          %1007 = vmatpush1.msra.mxu0 %v974
          %1008 = vmatprep.subr.mxu0 0.0
          %1009 = vmatpush1.msra.mxu0 %v975
          %1010 = vmatprep.subr.mxu0 0.0
          %1011 = vmatpush1.msra.mxu0 %v976
          %1012 = vmatprep.subr.mxu0 0.0
          %1013 = vmatpush1.msra.mxu0 %v977
          %1014 = vmatprep.subr.mxu0 0.0
          %1015 = vmatpush1.msra.mxu0 %v978
          %1016 = vmatprep.subr.mxu0 0.0
          %1017 = vmatpush1.msra.mxu0 %v979
          %1018 = vmatprep.subr.mxu0 0.0
          %1019 = vmatpush1.msra.mxu0 %v980
          %1020 = vmatprep.subr.mxu0 0.0
          %1021 = vmatpush1.msra.mxu0 0.0
          %1022 = vmatprep.subr.mxu0 0.0
          %1023 = vmatpush1.msra.mxu0 0.0
          %1024 = vmatprep.subr.mxu0 0.0
          %1025 = vmatpush1.msra.mxu0 0.0
          %1026 = vmatprep.subr.mxu0 0.0
          %1027 = vmatpush1.msra.mxu0 0.0
          %1028 = vmatprep.subr.mxu0 0.0
          %1029 = vmatpush1.msra.mxu0 0.0
          %1030 = vmatprep.subr.mxu0 0.0
          %1031 = vmatpush1.msra.mxu0 0.0
          %1032 = vmatprep.subr.mxu0 0.0
          %1033 = vmatpush1.msra.mxu0 0.0
          %1034 = vmatprep.subr.mxu0 0.0
          %1035 = vmatpush1.msra.mxu0 0.0
          %1036 = vmatprep.subr.mxu0 0.0
          %1037 = vmatpush1.msra.mxu0 0.0
          %1038 = vmatprep.subr.mxu0 0.0
          %1039 = vmatpush1.msra.mxu0 0.0
          %1040 = vmatprep.subr.mxu0 0.0
          %1041 = vmatpush1.msra.mxu0 0.0
          %1042 = vmatprep.subr.mxu0 0.0
          %1043 = vmatpush1.msra.mxu0 0.0
          %1044 = vmatprep.subr.mxu0 0.0
          %1045 = vmatpush1.msra.mxu0 0.0
          %1046 = vmatprep.subr.mxu0 0.0
          %1047 = vmatpush1.msra.mxu0 0.0
          %1048 = vmatprep.subr.mxu0 0.0
          %1049 = vmatpush1.msra.mxu0 0.0
          %1050 = vmatprep.subr.mxu0 0.0
          %1051 = vmatpush1.msra.mxu0 0.0
          %1052 = vmatprep.mubr.f32.mxu0 0.0
          %1053 = vmatmul.mubr.f32.gmra.mrb[0].mxu0 %v865
          %v1054 = vpop.f32.mrb[0].mxu0
          %v1055 = vadd.f32 %v986, %v1054
          %v1056 = vpop.f32.mrb[0].mxu0
          %1057 = vmatprep.mubr.f32.mxu0 0.0
          %1058 = vmatmul.mubr.f32.gmra.mrb[0].mxu0 %v866
          %v1059 = vpop.f32.mrb[0].mxu0
          %v1060 = vadd.f32 %v986, %v1059
          %v1061 = vpop.f32.mrb[0].mxu0
          %1062 = vdwg.mxu0
          %vm1063 = vcmask 261120
          %1064 = vst.msk [vmem:[#allocation2] sm:$0xff] %vm1063, %v957
          %1065 = vst.msk [vmem:[#allocation2 + $0x8] sm:$0xff] %vm1063, %v962
          %1066 = vst.msk [vmem:[#allocation3] sm:$0xff] %vm1063, %v1055
          %1067 = vst.msk [vmem:[#allocation3 + $0x8] sm:$0xff] %vm1063, %v1060
          %1070 = vrot.lane.b32.xlu0 %v957, 96
          %v1071 = vpop.permute.xlu0 %1070
          %1072 = vrot.lane.b32.xlu0 %v962, 96
          %v1073 = vpop.permute.xlu0 %1072
          %s1076 = scalar_lea.vmem [#allocation2], 16
          %1077 = vst.msk [vmem:[%s1076] sm:$0xff] %vm1063, %v1071
          %1078 = vst.msk [vmem:[%s1076 + $0x8] sm:$0xff] %vm1063, %v1073
          %1081 = vrot.lane.b32.xlu0 %v1055, 96
          %v1082 = vpop.permute.xlu0 %1081
          %1083 = vrot.lane.b32.xlu0 %v1060, 96
          %v1084 = vpop.permute.xlu0 %1083
          %s1087 = scalar_lea.vmem [#allocation3], 16
          %1088 = vst.msk [vmem:[%s1087] sm:$0xff] %vm1063, %v1082
          %1089 = vst.msk [vmem:[%s1087 + $0x8] sm:$0xff] %vm1063, %v1084
          %1090 = vrot.lane.b32.xlu0 %v957, 64
          %v1091 = vpop.permute.xlu0 %1090
          %1092 = vrot.lane.b32.xlu0 %v962, 64
          %v1093 = vpop.permute.xlu0 %1092
          %s1096 = scalar_lea.vmem [#allocation2], 32
          %1097 = vst.msk [vmem:[%s1096] sm:$0xff] %vm1063, %v1091
          %1098 = vst.msk [vmem:[%s1096 + $0x8] sm:$0xff] %vm1063, %v1093
          %1099 = vrot.lane.b32.xlu0 %v1055, 64
          %v1100 = vpop.permute.xlu0 %1099
          %1101 = vrot.lane.b32.xlu0 %v1060, 64
          %v1102 = vpop.permute.xlu0 %1101
          %s1105 = scalar_lea.vmem [#allocation3], 32
          %1106 = vst.msk [vmem:[%s1105] sm:$0xff] %vm1063, %v1100
          %1107 = vst.msk [vmem:[%s1105 + $0x8] sm:$0xff] %vm1063, %v1102
          %1108 = vrot.lane.b32.xlu0 %v957, 32
          %v1109 = vpop.permute.xlu0 %1108
          %1110 = vrot.lane.b32.xlu0 %v962, 32
          %v1111 = vpop.permute.xlu0 %1110
          %s1114 = scalar_lea.vmem [#allocation2], 48
          %1115 = vst.msk [vmem:[%s1114] sm:$0xff] %vm1063, %v1109
          %1116 = vst.msk [vmem:[%s1114 + $0x8] sm:$0xff] %vm1063, %v1111
          %1117 = vrot.lane.b32.xlu0 %v1055, 32
          %v1118 = vpop.permute.xlu0 %1117
          %1119 = vrot.lane.b32.xlu0 %v1060, 32
          %v1120 = vpop.permute.xlu0 %1119
          %s1123 = scalar_lea.vmem [#allocation3], 48
          %1124 = vst.msk [vmem:[%s1123] sm:$0xff] %vm1063, %v1118
          %1125 = vst.msk [vmem:[%s1123 + $0x8] sm:$0xff] %vm1063, %v1120
        $region168: #{tpu_custom_call.1} parent=91 // pred_fallthru
          _
        %v1126 = vld [vmem:[%s730] sm:$0xff]
        %v1127 = vld [vmem:[#allocation9] sm:$0xff]
        %v1128 = vld [vmem:[#allocation9 + $0x8] sm:$0xff]
        %v1129 = vld [vmem:[#allocation9 + $0x10] sm:$0xff]
        %v1130 = vld [vmem:[#allocation9 + $0x18] sm:$0xff]
        %v1131 = vld [vmem:[#allocation9 + $0x20] sm:$0xff]
        %v1132 = vld [vmem:[#allocation9 + $0x28] sm:$0xff]
        %v1133 = vld [vmem:[#allocation9 + $0x30] sm:$0xff]
        %v1134 = vld [vmem:[#allocation9 + $0x38] sm:$0xff]
        %v1135 = vld [vmem:[#allocation9 + $0x40] sm:$0xff]
        %v1136 = vld [vmem:[#allocation9 + $0x48] sm:$0xff]
        %v1137 = vld [vmem:[#allocation9 + $0x50] sm:$0xff]
        %v1138 = vld [vmem:[#allocation9 + $0x58] sm:$0xff]
        %v1139 = vld [vmem:[#allocation9 + $0x60] sm:$0xff]
        %v1140 = vld [vmem:[#allocation9 + $0x68] sm:$0xff]
        %v1141 = vld [vmem:[#allocation9 + $0x70] sm:$0xff]
        %v1142 = vld [vmem:[#allocation9 + $0x78] sm:$0xff]
        %v1143 = vld [vmem:[#allocation10] sm:$0x1]
        %v1145 = vlaneseq
        %v1146 = vshrl.u32 %v1145, 7
        %v1147 = vsub.s32 0, %v1146
        %v1148 = vrot.slane %v1143, %v1147
        %1150 = vmatprep.subr.mxu0 0.0
        %1151 = vmatpush1.msra.mxu0 %v1127
        %1152 = vmatprep.subr.mxu0 0.0
        %1153 = vmatpush1.msra.mxu0 %v1128
        %1154 = vmatprep.subr.mxu0 0.0
        %1155 = vmatpush1.msra.mxu0 %v1129
        %1156 = vmatprep.subr.mxu0 0.0
        %1157 = vmatpush1.msra.mxu0 %v1130
        %1158 = vmatprep.subr.mxu0 0.0
        %1159 = vmatpush1.msra.mxu0 %v1131
        %1160 = vmatprep.subr.mxu0 0.0
        %1161 = vmatpush1.msra.mxu0 %v1132
        %1162 = vmatprep.subr.mxu0 0.0
        %1163 = vmatpush1.msra.mxu0 %v1133
        %1164 = vmatprep.subr.mxu0 0.0
        %1165 = vmatpush1.msra.mxu0 %v1134
        %1166 = vmatprep.subr.mxu0 0.0
        %1167 = vmatpush1.msra.mxu0 %v1135
        %1168 = vmatprep.subr.mxu0 0.0
        %1169 = vmatpush1.msra.mxu0 %v1136
        %1170 = vmatprep.subr.mxu0 0.0
        %1171 = vmatpush1.msra.mxu0 %v1137
        %1172 = vmatprep.subr.mxu0 0.0
        %1173 = vmatpush1.msra.mxu0 %v1138
        %1174 = vmatprep.subr.mxu0 0.0
        %1175 = vmatpush1.msra.mxu0 %v1139
        %1176 = vmatprep.subr.mxu0 0.0
        %1177 = vmatpush1.msra.mxu0 %v1140
        %1178 = vmatprep.subr.mxu0 0.0
        %1179 = vmatpush1.msra.mxu0 %v1141
        %1180 = vmatprep.subr.mxu0 0.0
        %1181 = vmatpush1.msra.mxu0 %v1142
        %1182 = vmatprep.subr.mxu0 0.0
        %1183 = vmatpush1.msra.mxu0 0.0
        %1184 = vmatprep.subr.mxu0 0.0
        %1185 = vmatpush1.msra.mxu0 0.0
        %1186 = vmatprep.subr.mxu0 0.0
        %1187 = vmatpush1.msra.mxu0 0.0
        %1188 = vmatprep.subr.mxu0 0.0
        %1189 = vmatpush1.msra.mxu0 0.0
        %1190 = vmatprep.subr.mxu0 0.0
        %1191 = vmatpush1.msra.mxu0 0.0
        %1192 = vmatprep.subr.mxu0 0.0
        %1193 = vmatpush1.msra.mxu0 0.0
        %1194 = vmatprep.subr.mxu0 0.0
        %1195 = vmatpush1.msra.mxu0 0.0
        %1196 = vmatprep.subr.mxu0 0.0
        %1197 = vmatpush1.msra.mxu0 0.0
        %1198 = vmatprep.subr.mxu0 0.0
        %1199 = vmatpush1.msra.mxu0 0.0
        %1200 = vmatprep.subr.mxu0 0.0
        %1201 = vmatpush1.msra.mxu0 0.0
        %1202 = vmatprep.subr.mxu0 0.0
        %1203 = vmatpush1.msra.mxu0 0.0
        %1204 = vmatprep.subr.mxu0 0.0
        %1205 = vmatpush1.msra.mxu0 0.0
        %1206 = vmatprep.subr.mxu0 0.0
        %1207 = vmatpush1.msra.mxu0 0.0
        %1208 = vmatprep.subr.mxu0 0.0
        %1209 = vmatpush1.msra.mxu0 0.0
        %1210 = vmatprep.subr.mxu0 0.0
        %1211 = vmatpush1.msra.mxu0 0.0
        %1212 = vmatprep.subr.mxu0 0.0
        %1213 = vmatpush1.msra.mxu0 0.0
        %1214 = vmatprep.mubr.f32.mxu0 0.0
        %1215 = vmatmul.mubr.f32.gmra.mrb[0].mxu0 %v1126
        %v1216 = vpop.f32.mrb[0].mxu0
        %v1217 = vadd.f32 %v1148, %v1216
        %v1218 = vpop.f32.mrb[0].mxu0
        %1219 = vdwg.mxu0
        %v1220 = vmul.f32 %v1217, 0.17677669
        %1222 = vrot.lane.b32.xlu0 %v1220, 96
        %v1223 = vpop.permute.xlu0 %1222
        %1224 = vrot.lane.b32.xlu0 %v1220, 64
        %v1225 = vpop.permute.xlu0 %1224
        %1226 = vrot.lane.b32.xlu0 %v1220, 32
        %v1227 = vpop.permute.xlu0 %1226
        %v1228 = vld [vmem:[#allocation2] sm:$0xff]
        %v1229 = vld [vmem:[#allocation2 + $0x8] sm:$0xff]
        %v1230 = vld [vmem:[#allocation2 + $0x10] sm:$0xff]
        %v1231 = vld [vmem:[#allocation2 + $0x18] sm:$0xff]
        %v1232 = vld [vmem:[#allocation2 + $0x20] sm:$0xff]
        %v1233 = vld [vmem:[#allocation2 + $0x28] sm:$0xff]
        %v1234 = vld [vmem:[#allocation2 + $0x30] sm:$0xff]
        %v1235 = vld [vmem:[#allocation2 + $0x38] sm:$0xff]
        %v1236 = vld [vmem:[#allocation3] sm:$0xff]
        %v1237 = vld [vmem:[#allocation3 + $0x8] sm:$0xff]
        %v1238 = vld [vmem:[#allocation3 + $0x10] sm:$0xff]
        %v1239 = vld [vmem:[#allocation3 + $0x18] sm:$0xff]
        %v1240 = vld [vmem:[#allocation3 + $0x20] sm:$0xff]
        %v1241 = vld [vmem:[#allocation3 + $0x28] sm:$0xff]
        %v1242 = vld [vmem:[#allocation3 + $0x30] sm:$0xff]
        %v1243 = vld [vmem:[#allocation3 + $0x38] sm:$0xff]
        %vm1244 = vcmask 261120
        %v1245 = vsel %vm1244, %v1220, 0
        %v1248 = vsel %vm1244, %v1228, 0
        %v1251 = vsel %vm1244, %v1229, 0
        %1253 = vmatprep.subr.mxu0 0.0
        %1254 = vmatpush1.xpose.msra.mxu0 %v1248
        %1255 = vmatprep.subr.mxu0 0.0
        %1256 = vmatpush1.xpose.msra.mxu0 %v1251
        %1257 = vmatprep.subr.mxu0 0.0
        %1258 = vmatpush1.xpose.msra.mxu0 0.0
        %1259 = vmatprep.subr.mxu0 0.0
        %1260 = vmatpush1.xpose.msra.mxu0 0.0
        %1261 = vmatprep.subr.mxu0 0.0
        %1262 = vmatpush1.xpose.msra.mxu0 0.0
        %1263 = vmatprep.subr.mxu0 0.0
        %1264 = vmatpush1.xpose.msra.mxu0 0.0
        %1265 = vmatprep.subr.mxu0 0.0
        %1266 = vmatpush1.xpose.msra.mxu0 0.0
        %1267 = vmatprep.subr.mxu0 0.0
        %1268 = vmatpush1.xpose.msra.mxu0 0.0
        %1269 = vmatprep.subr.mxu0 0.0
        %1270 = vmatpush1.xpose.msra.mxu0 0.0
        %1271 = vmatprep.subr.mxu0 0.0
        %1272 = vmatpush1.xpose.msra.mxu0 0.0
        %1273 = vmatprep.subr.mxu0 0.0
        %1274 = vmatpush1.xpose.msra.mxu0 0.0
        %1275 = vmatprep.subr.mxu0 0.0
        %1276 = vmatpush1.xpose.msra.mxu0 0.0
        %1277 = vmatprep.subr.mxu0 0.0
        %1278 = vmatpush1.xpose.msra.mxu0 0.0
        %1279 = vmatprep.subr.mxu0 0.0
        %1280 = vmatpush1.xpose.msra.mxu0 0.0
        %1281 = vmatprep.subr.mxu0 0.0
        %1282 = vmatpush1.xpose.msra.mxu0 0.0
        %1283 = vmatprep.subr.mxu0 0.0
        %1284 = vmatpush1.xpose.msra.mxu0 0.0
        %1285 = vmatprep.subr.mxu0 0.0
        %1286 = vmatpush1.xpose.msra.mxu0 0.0
        %1287 = vmatprep.subr.mxu0 0.0
        %1288 = vmatpush1.xpose.msra.mxu0 0.0
        %1289 = vmatprep.subr.mxu0 0.0
        %1290 = vmatpush1.xpose.msra.mxu0 0.0
        %1291 = vmatprep.subr.mxu0 0.0
        %1292 = vmatpush1.xpose.msra.mxu0 0.0
        %1293 = vmatprep.subr.mxu0 0.0
        %1294 = vmatpush1.xpose.msra.mxu0 0.0
        %1295 = vmatprep.subr.mxu0 0.0
        %1296 = vmatpush1.xpose.msra.mxu0 0.0
        %1297 = vmatprep.subr.mxu0 0.0
        %1298 = vmatpush1.xpose.msra.mxu0 0.0
        %1299 = vmatprep.subr.mxu0 0.0
        %1300 = vmatpush1.xpose.msra.mxu0 0.0
        %1301 = vmatprep.subr.mxu0 0.0
        %1302 = vmatpush1.xpose.msra.mxu0 0.0
        %1303 = vmatprep.subr.mxu0 0.0
        %1304 = vmatpush1.xpose.msra.mxu0 0.0
        %1305 = vmatprep.subr.mxu0 0.0
        %1306 = vmatpush1.xpose.msra.mxu0 0.0
        %1307 = vmatprep.subr.mxu0 0.0
        %1308 = vmatpush1.xpose.msra.mxu0 0.0
        %1309 = vmatprep.subr.mxu0 0.0
        %1310 = vmatpush1.xpose.msra.mxu0 0.0
        %1311 = vmatprep.subr.mxu0 0.0
        %1312 = vmatpush1.xpose.msra.mxu0 0.0
        %1313 = vmatprep.subr.mxu0 0.0
        %1314 = vmatpush1.xpose.msra.mxu0 0.0
        %1315 = vmatprep.subr.mxu0 0.0
        %1316 = vmatpush1.xpose.msra.mxu0 0.0
        %1317 = vmatprep.mubr.f32.mxu0 0.0
        %1318 = vmatmul.mubr.f32.gmra.mrb[0].mxu0 %v1245
        %v1319 = vpop.f32.mrb[0].mxu0
        %v1320 = vadd.f32 0.0, %v1319
        %v1321 = vpop.f32.mrb[0].mxu0
        %1322 = vdwg.mxu0
        %v1323 = vsel %vm1244, %v1223, 0
        %v1326 = vsel %vm1244, %v1230, 0
        %v1329 = vsel %vm1244, %v1231, 0
        %1331 = vmatprep.subr.mxu0 0.0
        %1332 = vmatpush1.xpose.msra.mxu0 %v1326
        %1333 = vmatprep.subr.mxu0 0.0
        %1334 = vmatpush1.xpose.msra.mxu0 %v1329
        %1335 = vmatprep.subr.mxu0 0.0
        %1336 = vmatpush1.xpose.msra.mxu0 0.0
        %1337 = vmatprep.subr.mxu0 0.0
        %1338 = vmatpush1.xpose.msra.mxu0 0.0
        %1339 = vmatprep.subr.mxu0 0.0
        %1340 = vmatpush1.xpose.msra.mxu0 0.0
        %1341 = vmatprep.subr.mxu0 0.0
        %1342 = vmatpush1.xpose.msra.mxu0 0.0
        %1343 = vmatprep.subr.mxu0 0.0
        %1344 = vmatpush1.xpose.msra.mxu0 0.0
        %1345 = vmatprep.subr.mxu0 0.0
        %1346 = vmatpush1.xpose.msra.mxu0 0.0
        %1347 = vmatprep.subr.mxu0 0.0
        %1348 = vmatpush1.xpose.msra.mxu0 0.0
        %1349 = vmatprep.subr.mxu0 0.0
        %1350 = vmatpush1.xpose.msra.mxu0 0.0
        %1351 = vmatprep.subr.mxu0 0.0
        %1352 = vmatpush1.xpose.msra.mxu0 0.0
        %1353 = vmatprep.subr.mxu0 0.0
        %1354 = vmatpush1.xpose.msra.mxu0 0.0
        %1355 = vmatprep.subr.mxu0 0.0
        %1356 = vmatpush1.xpose.msra.mxu0 0.0
        %1357 = vmatprep.subr.mxu0 0.0
        %1358 = vmatpush1.xpose.msra.mxu0 0.0
        %1359 = vmatprep.subr.mxu0 0.0
        %1360 = vmatpush1.xpose.msra.mxu0 0.0
        %1361 = vmatprep.subr.mxu0 0.0
        %1362 = vmatpush1.xpose.msra.mxu0 0.0
        %1363 = vmatprep.subr.mxu0 0.0
        %1364 = vmatpush1.xpose.msra.mxu0 0.0
        %1365 = vmatprep.subr.mxu0 0.0
        %1366 = vmatpush1.xpose.msra.mxu0 0.0
        %1367 = vmatprep.subr.mxu0 0.0
        %1368 = vmatpush1.xpose.msra.mxu0 0.0
        %1369 = vmatprep.subr.mxu0 0.0
        %1370 = vmatpush1.xpose.msra.mxu0 0.0
        %1371 = vmatprep.subr.mxu0 0.0
        %1372 = vmatpush1.xpose.msra.mxu0 0.0
        %1373 = vmatprep.subr.mxu0 0.0
        %1374 = vmatpush1.xpose.msra.mxu0 0.0
        %1375 = vmatprep.subr.mxu0 0.0
        %1376 = vmatpush1.xpose.msra.mxu0 0.0
        %1377 = vmatprep.subr.mxu0 0.0
        %1378 = vmatpush1.xpose.msra.mxu0 0.0
        %1379 = vmatprep.subr.mxu0 0.0
        %1380 = vmatpush1.xpose.msra.mxu0 0.0
        %1381 = vmatprep.subr.mxu0 0.0
        %1382 = vmatpush1.xpose.msra.mxu0 0.0
        %1383 = vmatprep.subr.mxu0 0.0
        %1384 = vmatpush1.xpose.msra.mxu0 0.0
        %1385 = vmatprep.subr.mxu0 0.0
        %1386 = vmatpush1.xpose.msra.mxu0 0.0
        %1387 = vmatprep.subr.mxu0 0.0
        %1388 = vmatpush1.xpose.msra.mxu0 0.0
        %1389 = vmatprep.subr.mxu0 0.0
        %1390 = vmatpush1.xpose.msra.mxu0 0.0
        %1391 = vmatprep.subr.mxu0 0.0
        %1392 = vmatpush1.xpose.msra.mxu0 0.0
        %1393 = vmatprep.subr.mxu0 0.0
        %1394 = vmatpush1.xpose.msra.mxu0 0.0
        %1395 = vmatprep.mubr.f32.mxu0 0.0
        %1396 = vmatmul.mubr.f32.gmra.mrb[0].mxu0 %v1323
        %v1397 = vpop.f32.mrb[0].mxu0
        %v1398 = vadd.f32 0.0, %v1397
        %v1399 = vpop.f32.mrb[0].mxu0
        %1400 = vdwg.mxu0
        %v1401 = vsel %vm1244, %v1225, 0
        %v1404 = vsel %vm1244, %v1232, 0
        %v1407 = vsel %vm1244, %v1233, 0
        %1409 = vmatprep.subr.mxu0 0.0
        %1410 = vmatpush1.xpose.msra.mxu0 %v1404
        %1411 = vmatprep.subr.mxu0 0.0
        %1412 = vmatpush1.xpose.msra.mxu0 %v1407
        %1413 = vmatprep.subr.mxu0 0.0
        %1414 = vmatpush1.xpose.msra.mxu0 0.0
        %1415 = vmatprep.subr.mxu0 0.0
        %1416 = vmatpush1.xpose.msra.mxu0 0.0
        %1417 = vmatprep.subr.mxu0 0.0
        %1418 = vmatpush1.xpose.msra.mxu0 0.0
        %1419 = vmatprep.subr.mxu0 0.0
        %1420 = vmatpush1.xpose.msra.mxu0 0.0
        %1421 = vmatprep.subr.mxu0 0.0
        %1422 = vmatpush1.xpose.msra.mxu0 0.0
        %1423 = vmatprep.subr.mxu0 0.0
        %1424 = vmatpush1.xpose.msra.mxu0 0.0
        %1425 = vmatprep.subr.mxu0 0.0
        %1426 = vmatpush1.xpose.msra.mxu0 0.0
        %1427 = vmatprep.subr.mxu0 0.0
        %1428 = vmatpush1.xpose.msra.mxu0 0.0
        %1429 = vmatprep.subr.mxu0 0.0
        %1430 = vmatpush1.xpose.msra.mxu0 0.0
        %1431 = vmatprep.subr.mxu0 0.0
        %1432 = vmatpush1.xpose.msra.mxu0 0.0
        %1433 = vmatprep.subr.mxu0 0.0
        %1434 = vmatpush1.xpose.msra.mxu0 0.0
        %1435 = vmatprep.subr.mxu0 0.0
        %1436 = vmatpush1.xpose.msra.mxu0 0.0
        %1437 = vmatprep.subr.mxu0 0.0
        %1438 = vmatpush1.xpose.msra.mxu0 0.0
        %1439 = vmatprep.subr.mxu0 0.0
        %1440 = vmatpush1.xpose.msra.mxu0 0.0
        %1441 = vmatprep.subr.mxu0 0.0
        %1442 = vmatpush1.xpose.msra.mxu0 0.0
        %1443 = vmatprep.subr.mxu0 0.0
        %1444 = vmatpush1.xpose.msra.mxu0 0.0
        %1445 = vmatprep.subr.mxu0 0.0
        %1446 = vmatpush1.xpose.msra.mxu0 0.0
        %1447 = vmatprep.subr.mxu0 0.0
        %1448 = vmatpush1.xpose.msra.mxu0 0.0
        %1449 = vmatprep.subr.mxu0 0.0
        %1450 = vmatpush1.xpose.msra.mxu0 0.0
        %1451 = vmatprep.subr.mxu0 0.0
        %1452 = vmatpush1.xpose.msra.mxu0 0.0
        %1453 = vmatprep.subr.mxu0 0.0
        %1454 = vmatpush1.xpose.msra.mxu0 0.0
        %1455 = vmatprep.subr.mxu0 0.0
        %1456 = vmatpush1.xpose.msra.mxu0 0.0
        %1457 = vmatprep.subr.mxu0 0.0
        %1458 = vmatpush1.xpose.msra.mxu0 0.0
        %1459 = vmatprep.subr.mxu0 0.0
        %1460 = vmatpush1.xpose.msra.mxu0 0.0
        %1461 = vmatprep.subr.mxu0 0.0
        %1462 = vmatpush1.xpose.msra.mxu0 0.0
        %1463 = vmatprep.subr.mxu0 0.0
        %1464 = vmatpush1.xpose.msra.mxu0 0.0
        %1465 = vmatprep.subr.mxu0 0.0
        %1466 = vmatpush1.xpose.msra.mxu0 0.0
        %1467 = vmatprep.subr.mxu0 0.0
        %1468 = vmatpush1.xpose.msra.mxu0 0.0
        %1469 = vmatprep.subr.mxu0 0.0
        %1470 = vmatpush1.xpose.msra.mxu0 0.0
        %1471 = vmatprep.subr.mxu0 0.0
        %1472 = vmatpush1.xpose.msra.mxu0 0.0
        %1473 = vmatprep.mubr.f32.mxu0 0.0
        %1474 = vmatmul.mubr.f32.gmra.mrb[0].mxu0 %v1401
        %v1475 = vpop.f32.mrb[0].mxu0
        %v1476 = vadd.f32 0.0, %v1475
        %v1477 = vpop.f32.mrb[0].mxu0
        %1478 = vdwg.mxu0
        %v1479 = vsel %vm1244, %v1227, 0
        %v1482 = vsel %vm1244, %v1234, 0
        %v1485 = vsel %vm1244, %v1235, 0
        %1487 = vmatprep.subr.mxu0 0.0
        %1488 = vmatpush1.xpose.msra.mxu0 %v1482
        %1489 = vmatprep.subr.mxu0 0.0
        %1490 = vmatpush1.xpose.msra.mxu0 %v1485
        %1491 = vmatprep.subr.mxu0 0.0
        %1492 = vmatpush1.xpose.msra.mxu0 0.0
        %1493 = vmatprep.subr.mxu0 0.0
        %1494 = vmatpush1.xpose.msra.mxu0 0.0
        %1495 = vmatprep.subr.mxu0 0.0
        %1496 = vmatpush1.xpose.msra.mxu0 0.0
        %1497 = vmatprep.subr.mxu0 0.0
        %1498 = vmatpush1.xpose.msra.mxu0 0.0
        %1499 = vmatprep.subr.mxu0 0.0
        %1500 = vmatpush1.xpose.msra.mxu0 0.0
        %1501 = vmatprep.subr.mxu0 0.0
        %1502 = vmatpush1.xpose.msra.mxu0 0.0
        %1503 = vmatprep.subr.mxu0 0.0
        %1504 = vmatpush1.xpose.msra.mxu0 0.0
        %1505 = vmatprep.subr.mxu0 0.0
        %1506 = vmatpush1.xpose.msra.mxu0 0.0
        %1507 = vmatprep.subr.mxu0 0.0
        %1508 = vmatpush1.xpose.msra.mxu0 0.0
        %1509 = vmatprep.subr.mxu0 0.0
        %1510 = vmatpush1.xpose.msra.mxu0 0.0
        %1511 = vmatprep.subr.mxu0 0.0
        %1512 = vmatpush1.xpose.msra.mxu0 0.0
        %1513 = vmatprep.subr.mxu0 0.0
        %1514 = vmatpush1.xpose.msra.mxu0 0.0
        %1515 = vmatprep.subr.mxu0 0.0
        %1516 = vmatpush1.xpose.msra.mxu0 0.0
        %1517 = vmatprep.subr.mxu0 0.0
        %1518 = vmatpush1.xpose.msra.mxu0 0.0
        %1519 = vmatprep.subr.mxu0 0.0
        %1520 = vmatpush1.xpose.msra.mxu0 0.0
        %1521 = vmatprep.subr.mxu0 0.0
        %1522 = vmatpush1.xpose.msra.mxu0 0.0
        %1523 = vmatprep.subr.mxu0 0.0
        %1524 = vmatpush1.xpose.msra.mxu0 0.0
        %1525 = vmatprep.subr.mxu0 0.0
        %1526 = vmatpush1.xpose.msra.mxu0 0.0
        %1527 = vmatprep.subr.mxu0 0.0
        %1528 = vmatpush1.xpose.msra.mxu0 0.0
        %1529 = vmatprep.subr.mxu0 0.0
        %1530 = vmatpush1.xpose.msra.mxu0 0.0
        %1531 = vmatprep.subr.mxu0 0.0
        %1532 = vmatpush1.xpose.msra.mxu0 0.0
        %1533 = vmatprep.subr.mxu0 0.0
        %1534 = vmatpush1.xpose.msra.mxu0 0.0
        %1535 = vmatprep.subr.mxu0 0.0
        %1536 = vmatpush1.xpose.msra.mxu0 0.0
        %1537 = vmatprep.subr.mxu0 0.0
        %1538 = vmatpush1.xpose.msra.mxu0 0.0
        %1539 = vmatprep.subr.mxu0 0.0
        %1540 = vmatpush1.xpose.msra.mxu0 0.0
        %1541 = vmatprep.subr.mxu0 0.0
        %1542 = vmatpush1.xpose.msra.mxu0 0.0
        %1543 = vmatprep.subr.mxu0 0.0
        %1544 = vmatpush1.xpose.msra.mxu0 0.0
        %1545 = vmatprep.subr.mxu0 0.0
        %1546 = vmatpush1.xpose.msra.mxu0 0.0
        %1547 = vmatprep.subr.mxu0 0.0
        %1548 = vmatpush1.xpose.msra.mxu0 0.0
        %1549 = vmatprep.subr.mxu0 0.0
        %1550 = vmatpush1.xpose.msra.mxu0 0.0
        %1551 = vmatprep.mubr.f32.mxu0 0.0
        %1552 = vmatmul.mubr.f32.gmra.mrb[0].mxu0 %v1479
        %v1553 = vpop.f32.mrb[0].mxu0
        %v1554 = vadd.f32 0.0, %v1553
        %v1555 = vpop.f32.mrb[0].mxu0
        %1556 = vdwg.mxu0
        %vm1557 = vcmask 130048
        %v1558 = vsel %vm1557, %v1320, -inf
        %1559 = vmax.xlane.f32.xlu0 %v1558
        %v1560 = vpop.xlane.xlu0 %1559
        %v1561 = vsel %vm1557, %v1398, -inf
        %1562 = vmax.xlane.f32.xlu0 %v1561
        %v1563 = vpop.xlane.xlu0 %1562
        %v1564 = vsel %vm1557, %v1476, -inf
        %1565 = vmax.xlane.f32.xlu0 %v1564
        %v1566 = vpop.xlane.xlu0 %1565
        %v1567 = vsel %vm1557, %v1554, -inf
        %1568 = vmax.xlane.f32.xlu0 %v1567
        %v1569 = vpop.xlane.xlu0 %1568
        %v1570 = vsub.f32 %v1320, %v1560
        %v1571 = vsub.f32 %v1398, %v1563
        %v1572 = vsub.f32 %v1476, %v1566
        %v1573 = vsub.f32 %v1554, %v1569
        %v1574 = vmul.f32 %v1570, 1.442695
        %v1575 = vpow.pop %v1574
        %v1576 = vmul.f32 %v1571, 1.442695
        %v1577 = vpow.pop %v1576
        %v1578 = vmul.f32 %v1572, 1.442695
        %v1579 = vpow.pop %v1578
        %v1580 = vmul.f32 %v1573, 1.442695
        %v1581 = vpow.pop %v1580
        %v1582 = vsel %vm1557, %v1575, 0.0
        %1583 = vadd.xlane.f32.xlu0 %v1582
        %v1584 = vpop.xlane.xlu0 %1583
        %v1585 = vsel %vm1557, %v1577, 0.0
        %1586 = vadd.xlane.f32.xlu0 %v1585
        %v1587 = vpop.xlane.xlu0 %1586
        %v1588 = vsel %vm1557, %v1579, 0.0
        %1589 = vadd.xlane.f32.xlu0 %v1588
        %v1590 = vpop.xlane.xlu0 %1589
        %v1591 = vsel %vm1557, %v1581, 0.0
        %1592 = vadd.xlane.f32.xlu0 %v1591
        %v1593 = vpop.xlane.xlu0 %1592
        %v1594 = vrcp.pop %v1584
        %v1595 = vrcp.pop %v1587
        %v1596 = vrcp.pop %v1590
        %v1597 = vrcp.pop %v1593
        %v1598 = vmul.f32 %v1575, %v1594
        %v1599 = vmul.f32 %v1577, %v1595
        %v1600 = vmul.f32 %v1579, %v1596
        %v1601 = vmul.f32 %v1581, %v1597
        %v1603 = vsel %vm1557, %v1598, 0
        %1605 = vmatprep.subr.mxu0 0.0
        %1606 = vmatpush1.msra.mxu0 %v1236
        %1607 = vmatprep.subr.mxu0 0.0
        %1608 = vmatpush1.msra.mxu0 %v1237
        %1609 = vmatprep.subr.mxu0 0.0
        %1610 = vmatpush1.msra.mxu0 0.0
        %1611 = vmatprep.subr.mxu0 0.0
        %1612 = vmatpush1.msra.mxu0 0.0
        %1613 = vmatprep.subr.mxu0 0.0
        %1614 = vmatpush1.msra.mxu0 0.0
        %1615 = vmatprep.subr.mxu0 0.0
        %1616 = vmatpush1.msra.mxu0 0.0
        %1617 = vmatprep.subr.mxu0 0.0
        %1618 = vmatpush1.msra.mxu0 0.0
        %1619 = vmatprep.subr.mxu0 0.0
        %1620 = vmatpush1.msra.mxu0 0.0
        %1621 = vmatprep.subr.mxu0 0.0
        %1622 = vmatpush1.msra.mxu0 0.0
        %1623 = vmatprep.subr.mxu0 0.0
        %1624 = vmatpush1.msra.mxu0 0.0
        %1625 = vmatprep.subr.mxu0 0.0
        %1626 = vmatpush1.msra.mxu0 0.0
        %1627 = vmatprep.subr.mxu0 0.0
        %1628 = vmatpush1.msra.mxu0 0.0
        %1629 = vmatprep.subr.mxu0 0.0
        %1630 = vmatpush1.msra.mxu0 0.0
        %1631 = vmatprep.subr.mxu0 0.0
        %1632 = vmatpush1.msra.mxu0 0.0
        %1633 = vmatprep.subr.mxu0 0.0
        %1634 = vmatpush1.msra.mxu0 0.0
        %1635 = vmatprep.subr.mxu0 0.0
        %1636 = vmatpush1.msra.mxu0 0.0
        %1637 = vmatprep.subr.mxu0 0.0
        %1638 = vmatpush1.msra.mxu0 0.0
        %1639 = vmatprep.subr.mxu0 0.0
        %1640 = vmatpush1.msra.mxu0 0.0
        %1641 = vmatprep.subr.mxu0 0.0
        %1642 = vmatpush1.msra.mxu0 0.0
        %1643 = vmatprep.subr.mxu0 0.0
        %1644 = vmatpush1.msra.mxu0 0.0
        %1645 = vmatprep.subr.mxu0 0.0
        %1646 = vmatpush1.msra.mxu0 0.0
        %1647 = vmatprep.subr.mxu0 0.0
        %1648 = vmatpush1.msra.mxu0 0.0
        %1649 = vmatprep.subr.mxu0 0.0
        %1650 = vmatpush1.msra.mxu0 0.0
        %1651 = vmatprep.subr.mxu0 0.0
        %1652 = vmatpush1.msra.mxu0 0.0
        %1653 = vmatprep.subr.mxu0 0.0
        %1654 = vmatpush1.msra.mxu0 0.0
        %1655 = vmatprep.subr.mxu0 0.0
        %1656 = vmatpush1.msra.mxu0 0.0
        %1657 = vmatprep.subr.mxu0 0.0
        %1658 = vmatpush1.msra.mxu0 0.0
        %1659 = vmatprep.subr.mxu0 0.0
        %1660 = vmatpush1.msra.mxu0 0.0
        %1661 = vmatprep.subr.mxu0 0.0
        %1662 = vmatpush1.msra.mxu0 0.0
        %1663 = vmatprep.subr.mxu0 0.0
        %1664 = vmatpush1.msra.mxu0 0.0
        %1665 = vmatprep.subr.mxu0 0.0
        %1666 = vmatpush1.msra.mxu0 0.0
        %1667 = vmatprep.subr.mxu0 0.0
        %1668 = vmatpush1.msra.mxu0 0.0
        %1669 = vmatprep.mubr.f32.mxu0 0.0
        %1670 = vmatmul.mubr.f32.gmra.mrb[0].mxu0 %v1603
        %v1671 = vpop.f32.mrb[0].mxu0
        %v1672 = vadd.f32 0.0, %v1671
        %v1673 = vpop.f32.mrb[0].mxu0
        %1674 = vdwg.mxu0
        %v1676 = vsel %vm1557, %v1599, 0
        %1678 = vmatprep.subr.mxu0 0.0
        %1679 = vmatpush1.msra.mxu0 %v1238
        %1680 = vmatprep.subr.mxu0 0.0
        %1681 = vmatpush1.msra.mxu0 %v1239
        %1682 = vmatprep.subr.mxu0 0.0
        %1683 = vmatpush1.msra.mxu0 0.0
        %1684 = vmatprep.subr.mxu0 0.0
        %1685 = vmatpush1.msra.mxu0 0.0
        %1686 = vmatprep.subr.mxu0 0.0
        %1687 = vmatpush1.msra.mxu0 0.0
        %1688 = vmatprep.subr.mxu0 0.0
        %1689 = vmatpush1.msra.mxu0 0.0
        %1690 = vmatprep.subr.mxu0 0.0
        %1691 = vmatpush1.msra.mxu0 0.0
        %1692 = vmatprep.subr.mxu0 0.0
        %1693 = vmatpush1.msra.mxu0 0.0
        %1694 = vmatprep.subr.mxu0 0.0
        %1695 = vmatpush1.msra.mxu0 0.0
        %1696 = vmatprep.subr.mxu0 0.0
        %1697 = vmatpush1.msra.mxu0 0.0
        %1698 = vmatprep.subr.mxu0 0.0
        %1699 = vmatpush1.msra.mxu0 0.0
        %1700 = vmatprep.subr.mxu0 0.0
        %1701 = vmatpush1.msra.mxu0 0.0
        %1702 = vmatprep.subr.mxu0 0.0
        %1703 = vmatpush1.msra.mxu0 0.0
        %1704 = vmatprep.subr.mxu0 0.0
        %1705 = vmatpush1.msra.mxu0 0.0
        %1706 = vmatprep.subr.mxu0 0.0
        %1707 = vmatpush1.msra.mxu0 0.0
        %1708 = vmatprep.subr.mxu0 0.0
        %1709 = vmatpush1.msra.mxu0 0.0
        %1710 = vmatprep.subr.mxu0 0.0
        %1711 = vmatpush1.msra.mxu0 0.0
        %1712 = vmatprep.subr.mxu0 0.0
        %1713 = vmatpush1.msra.mxu0 0.0
        %1714 = vmatprep.subr.mxu0 0.0
        %1715 = vmatpush1.msra.mxu0 0.0
        %1716 = vmatprep.subr.mxu0 0.0
        %1717 = vmatpush1.msra.mxu0 0.0
        %1718 = vmatprep.subr.mxu0 0.0
        %1719 = vmatpush1.msra.mxu0 0.0
        %1720 = vmatprep.subr.mxu0 0.0
        %1721 = vmatpush1.msra.mxu0 0.0
        %1722 = vmatprep.subr.mxu0 0.0
        %1723 = vmatpush1.msra.mxu0 0.0
        %1724 = vmatprep.subr.mxu0 0.0
        %1725 = vmatpush1.msra.mxu0 0.0
        %1726 = vmatprep.subr.mxu0 0.0
        %1727 = vmatpush1.msra.mxu0 0.0
        %1728 = vmatprep.subr.mxu0 0.0
        %1729 = vmatpush1.msra.mxu0 0.0
        %1730 = vmatprep.subr.mxu0 0.0
        %1731 = vmatpush1.msra.mxu0 0.0
        %1732 = vmatprep.subr.mxu0 0.0
        %1733 = vmatpush1.msra.mxu0 0.0
        %1734 = vmatprep.subr.mxu0 0.0
        %1735 = vmatpush1.msra.mxu0 0.0
        %1736 = vmatprep.subr.mxu0 0.0
        %1737 = vmatpush1.msra.mxu0 0.0
        %1738 = vmatprep.subr.mxu0 0.0
        %1739 = vmatpush1.msra.mxu0 0.0
        %1740 = vmatprep.subr.mxu0 0.0
        %1741 = vmatpush1.msra.mxu0 0.0
        %1742 = vmatprep.mubr.f32.mxu0 0.0
        %1743 = vmatmul.mubr.f32.gmra.mrb[0].mxu0 %v1676
        %v1744 = vpop.f32.mrb[0].mxu0
        %v1745 = vadd.f32 0.0, %v1744
        %v1746 = vpop.f32.mrb[0].mxu0
        %1747 = vdwg.mxu0
        %v1749 = vsel %vm1557, %v1600, 0
        %1751 = vmatprep.subr.mxu0 0.0
        %1752 = vmatpush1.msra.mxu0 %v1240
        %1753 = vmatprep.subr.mxu0 0.0
        %1754 = vmatpush1.msra.mxu0 %v1241
        %1755 = vmatprep.subr.mxu0 0.0
        %1756 = vmatpush1.msra.mxu0 0.0
        %1757 = vmatprep.subr.mxu0 0.0
        %1758 = vmatpush1.msra.mxu0 0.0
        %1759 = vmatprep.subr.mxu0 0.0
        %1760 = vmatpush1.msra.mxu0 0.0
        %1761 = vmatprep.subr.mxu0 0.0
        %1762 = vmatpush1.msra.mxu0 0.0
        %1763 = vmatprep.subr.mxu0 0.0
        %1764 = vmatpush1.msra.mxu0 0.0
        %1765 = vmatprep.subr.mxu0 0.0
        %1766 = vmatpush1.msra.mxu0 0.0
        %1767 = vmatprep.subr.mxu0 0.0
        %1768 = vmatpush1.msra.mxu0 0.0
        %1769 = vmatprep.subr.mxu0 0.0
        %1770 = vmatpush1.msra.mxu0 0.0
        %1771 = vmatprep.subr.mxu0 0.0
        %1772 = vmatpush1.msra.mxu0 0.0
        %1773 = vmatprep.subr.mxu0 0.0
        %1774 = vmatpush1.msra.mxu0 0.0
        %1775 = vmatprep.subr.mxu0 0.0
        %1776 = vmatpush1.msra.mxu0 0.0
        %1777 = vmatprep.subr.mxu0 0.0
        %1778 = vmatpush1.msra.mxu0 0.0
        %1779 = vmatprep.subr.mxu0 0.0
        %1780 = vmatpush1.msra.mxu0 0.0
        %1781 = vmatprep.subr.mxu0 0.0
        %1782 = vmatpush1.msra.mxu0 0.0
        %1783 = vmatprep.subr.mxu0 0.0
        %1784 = vmatpush1.msra.mxu0 0.0
        %1785 = vmatprep.subr.mxu0 0.0
        %1786 = vmatpush1.msra.mxu0 0.0
        %1787 = vmatprep.subr.mxu0 0.0
        %1788 = vmatpush1.msra.mxu0 0.0
        %1789 = vmatprep.subr.mxu0 0.0
        %1790 = vmatpush1.msra.mxu0 0.0
        %1791 = vmatprep.subr.mxu0 0.0
        %1792 = vmatpush1.msra.mxu0 0.0
        %1793 = vmatprep.subr.mxu0 0.0
        %1794 = vmatpush1.msra.mxu0 0.0
        %1795 = vmatprep.subr.mxu0 0.0
        %1796 = vmatpush1.msra.mxu0 0.0
        %1797 = vmatprep.subr.mxu0 0.0
        %1798 = vmatpush1.msra.mxu0 0.0
        %1799 = vmatprep.subr.mxu0 0.0
        %1800 = vmatpush1.msra.mxu0 0.0
        %1801 = vmatprep.subr.mxu0 0.0
        %1802 = vmatpush1.msra.mxu0 0.0
        %1803 = vmatprep.subr.mxu0 0.0
        %1804 = vmatpush1.msra.mxu0 0.0
        %1805 = vmatprep.subr.mxu0 0.0
        %1806 = vmatpush1.msra.mxu0 0.0
        %1807 = vmatprep.subr.mxu0 0.0
        %1808 = vmatpush1.msra.mxu0 0.0
        %1809 = vmatprep.subr.mxu0 0.0
        %1810 = vmatpush1.msra.mxu0 0.0
        %1811 = vmatprep.subr.mxu0 0.0
        %1812 = vmatpush1.msra.mxu0 0.0
        %1813 = vmatprep.subr.mxu0 0.0
        %1814 = vmatpush1.msra.mxu0 0.0
        %1815 = vmatprep.mubr.f32.mxu0 0.0
        %1816 = vmatmul.mubr.f32.gmra.mrb[0].mxu0 %v1749
        %v1817 = vpop.f32.mrb[0].mxu0
        %v1818 = vadd.f32 0.0, %v1817
        %v1819 = vpop.f32.mrb[0].mxu0
        %1820 = vdwg.mxu0
        %v1822 = vsel %vm1557, %v1601, 0
        %1824 = vmatprep.subr.mxu0 0.0
        %1825 = vmatpush1.msra.mxu0 %v1242
        %1826 = vmatprep.subr.mxu0 0.0
        %1827 = vmatpush1.msra.mxu0 %v1243
        %1828 = vmatprep.subr.mxu0 0.0
        %1829 = vmatpush1.msra.mxu0 0.0
        %1830 = vmatprep.subr.mxu0 0.0
        %1831 = vmatpush1.msra.mxu0 0.0
        %1832 = vmatprep.subr.mxu0 0.0
        %1833 = vmatpush1.msra.mxu0 0.0
        %1834 = vmatprep.subr.mxu0 0.0
        %1835 = vmatpush1.msra.mxu0 0.0
        %1836 = vmatprep.subr.mxu0 0.0
        %1837 = vmatpush1.msra.mxu0 0.0
        %1838 = vmatprep.subr.mxu0 0.0
        %1839 = vmatpush1.msra.mxu0 0.0
        %1840 = vmatprep.subr.mxu0 0.0
        %1841 = vmatpush1.msra.mxu0 0.0
        %1842 = vmatprep.subr.mxu0 0.0
        %1843 = vmatpush1.msra.mxu0 0.0
        %1844 = vmatprep.subr.mxu0 0.0
        %1845 = vmatpush1.msra.mxu0 0.0
        %1846 = vmatprep.subr.mxu0 0.0
        %1847 = vmatpush1.msra.mxu0 0.0
        %1848 = vmatprep.subr.mxu0 0.0
        %1849 = vmatpush1.msra.mxu0 0.0
        %1850 = vmatprep.subr.mxu0 0.0
        %1851 = vmatpush1.msra.mxu0 0.0
        %1852 = vmatprep.subr.mxu0 0.0
        %1853 = vmatpush1.msra.mxu0 0.0
        %1854 = vmatprep.subr.mxu0 0.0
        %1855 = vmatpush1.msra.mxu0 0.0
        %1856 = vmatprep.subr.mxu0 0.0
        %1857 = vmatpush1.msra.mxu0 0.0
        %1858 = vmatprep.subr.mxu0 0.0
        %1859 = vmatpush1.msra.mxu0 0.0
        %1860 = vmatprep.subr.mxu0 0.0
        %1861 = vmatpush1.msra.mxu0 0.0
        %1862 = vmatprep.subr.mxu0 0.0
        %1863 = vmatpush1.msra.mxu0 0.0
        %1864 = vmatprep.subr.mxu0 0.0
        %1865 = vmatpush1.msra.mxu0 0.0
        %1866 = vmatprep.subr.mxu0 0.0
        %1867 = vmatpush1.msra.mxu0 0.0
        %1868 = vmatprep.subr.mxu0 0.0
        %1869 = vmatpush1.msra.mxu0 0.0
        %1870 = vmatprep.subr.mxu0 0.0
        %1871 = vmatpush1.msra.mxu0 0.0
        %1872 = vmatprep.subr.mxu0 0.0
        %1873 = vmatpush1.msra.mxu0 0.0
        %1874 = vmatprep.subr.mxu0 0.0
        %1875 = vmatpush1.msra.mxu0 0.0
        %1876 = vmatprep.subr.mxu0 0.0
        %1877 = vmatpush1.msra.mxu0 0.0
        %1878 = vmatprep.subr.mxu0 0.0
        %1879 = vmatpush1.msra.mxu0 0.0
        %1880 = vmatprep.subr.mxu0 0.0
        %1881 = vmatpush1.msra.mxu0 0.0
        %1882 = vmatprep.subr.mxu0 0.0
        %1883 = vmatpush1.msra.mxu0 0.0
        %1884 = vmatprep.subr.mxu0 0.0
        %1885 = vmatpush1.msra.mxu0 0.0
        %1886 = vmatprep.subr.mxu0 0.0
        %1887 = vmatpush1.msra.mxu0 0.0
        %1888 = vmatprep.mubr.f32.mxu0 0.0
        %1889 = vmatmul.mubr.f32.gmra.mrb[0].mxu0 %v1822
        %v1890 = vpop.f32.mrb[0].mxu0
        %v1891 = vadd.f32 0.0, %v1890
        %v1892 = vpop.f32.mrb[0].mxu0
        %1893 = vdwg.mxu0
        %1895 = vrot.lane.b32.xlu0 %v1745, 32
        %v1896 = vpop.permute.xlu0 %1895
        %1899 = vrot.lane.b32.xlu0 %v1818, 64
        %v1900 = vpop.permute.xlu0 %1899
        %1903 = vrot.lane.b32.xlu0 %v1891, 96
        %v1904 = vpop.permute.xlu0 %1903
        %v1906 = vsel %vm1244, %v1672, %v1896
        %vm1907 = vcmask 523264
        %v1908 = vsel %vm1907, %v1906, %v1900
        %vm1909 = vcmask 785408
        %v1910 = vsel %vm1909, %v1908, %v1904
        %v1911 = vld [vmem:[#allocation18] sm:$0xff]
        %v1912 = vld [vmem:[#allocation18 + $0x8] sm:$0xff]
        %v1913 = vld [vmem:[#allocation18 + $0x10] sm:$0xff]
        %v1914 = vld [vmem:[#allocation18 + $0x18] sm:$0xff]
        %v1915 = vld [vmem:[#allocation18 + $0x20] sm:$0xff]
        %v1916 = vld [vmem:[#allocation18 + $0x28] sm:$0xff]
        %v1917 = vld [vmem:[#allocation18 + $0x30] sm:$0xff]
        %v1918 = vld [vmem:[#allocation18 + $0x38] sm:$0xff]
        %v1919 = vld [vmem:[#allocation18 + $0x40] sm:$0xff]
        %v1920 = vld [vmem:[#allocation18 + $0x48] sm:$0xff]
        %v1921 = vld [vmem:[#allocation18 + $0x50] sm:$0xff]
        %v1922 = vld [vmem:[#allocation18 + $0x58] sm:$0xff]
        %v1923 = vld [vmem:[#allocation18 + $0x60] sm:$0xff]
        %v1924 = vld [vmem:[#allocation18 + $0x68] sm:$0xff]
        %v1925 = vld [vmem:[#allocation18 + $0x70] sm:$0xff]
        %v1926 = vld [vmem:[#allocation18 + $0x78] sm:$0xff]
        %v1927 = vld [vmem:[#allocation19] sm:$0x1]
        %v1929 = vlaneseq
        %v1930 = vshrl.u32 %v1929, 7
        %v1931 = vsub.s32 0, %v1930
        %v1932 = vrot.slane %v1927, %v1931
        %1934 = vmatprep.subr.mxu0 0.0
        %1935 = vmatpush1.msra.mxu0 %v1911
        %1936 = vmatprep.subr.mxu0 0.0
        %1937 = vmatpush1.msra.mxu0 %v1912
        %1938 = vmatprep.subr.mxu0 0.0
        %1939 = vmatpush1.msra.mxu0 %v1913
        %1940 = vmatprep.subr.mxu0 0.0
        %1941 = vmatpush1.msra.mxu0 %v1914
        %1942 = vmatprep.subr.mxu0 0.0
        %1943 = vmatpush1.msra.mxu0 %v1915
        %1944 = vmatprep.subr.mxu0 0.0
        %1945 = vmatpush1.msra.mxu0 %v1916
        %1946 = vmatprep.subr.mxu0 0.0
        %1947 = vmatpush1.msra.mxu0 %v1917
        %1948 = vmatprep.subr.mxu0 0.0
        %1949 = vmatpush1.msra.mxu0 %v1918
        %1950 = vmatprep.subr.mxu0 0.0
        %1951 = vmatpush1.msra.mxu0 %v1919
        %1952 = vmatprep.subr.mxu0 0.0
        %1953 = vmatpush1.msra.mxu0 %v1920
        %1954 = vmatprep.subr.mxu0 0.0
        %1955 = vmatpush1.msra.mxu0 %v1921
        %1956 = vmatprep.subr.mxu0 0.0
        %1957 = vmatpush1.msra.mxu0 %v1922
        %1958 = vmatprep.subr.mxu0 0.0
        %1959 = vmatpush1.msra.mxu0 %v1923
        %1960 = vmatprep.subr.mxu0 0.0
        %1961 = vmatpush1.msra.mxu0 %v1924
        %1962 = vmatprep.subr.mxu0 0.0
        %1963 = vmatpush1.msra.mxu0 %v1925
        %1964 = vmatprep.subr.mxu0 0.0
        %1965 = vmatpush1.msra.mxu0 %v1926
        %1966 = vmatprep.subr.mxu0 0.0
        %1967 = vmatpush1.msra.mxu0 0.0
        %1968 = vmatprep.subr.mxu0 0.0
        %1969 = vmatpush1.msra.mxu0 0.0
        %1970 = vmatprep.subr.mxu0 0.0
        %1971 = vmatpush1.msra.mxu0 0.0
        %1972 = vmatprep.subr.mxu0 0.0
        %1973 = vmatpush1.msra.mxu0 0.0
        %1974 = vmatprep.subr.mxu0 0.0
        %1975 = vmatpush1.msra.mxu0 0.0
        %1976 = vmatprep.subr.mxu0 0.0
        %1977 = vmatpush1.msra.mxu0 0.0
        %1978 = vmatprep.subr.mxu0 0.0
        %1979 = vmatpush1.msra.mxu0 0.0
        %1980 = vmatprep.subr.mxu0 0.0
        %1981 = vmatpush1.msra.mxu0 0.0
        %1982 = vmatprep.subr.mxu0 0.0
        %1983 = vmatpush1.msra.mxu0 0.0
        %1984 = vmatprep.subr.mxu0 0.0
        %1985 = vmatpush1.msra.mxu0 0.0
        %1986 = vmatprep.subr.mxu0 0.0
        %1987 = vmatpush1.msra.mxu0 0.0
        %1988 = vmatprep.subr.mxu0 0.0
        %1989 = vmatpush1.msra.mxu0 0.0
        %1990 = vmatprep.subr.mxu0 0.0
        %1991 = vmatpush1.msra.mxu0 0.0
        %1992 = vmatprep.subr.mxu0 0.0
        %1993 = vmatpush1.msra.mxu0 0.0
        %1994 = vmatprep.subr.mxu0 0.0
        %1995 = vmatpush1.msra.mxu0 0.0
        %1996 = vmatprep.subr.mxu0 0.0
        %1997 = vmatpush1.msra.mxu0 0.0
        %1998 = vmatprep.mubr.f32.mxu0 0.0
        %1999 = vmatmul.mubr.f32.gmra.mrb[0].mxu0 %v1910
        %v2000 = vpop.f32.mrb[0].mxu0
        %v2001 = vadd.f32 %v1932, %v2000
        %v2002 = vpop.f32.mrb[0].mxu0
        %2003 = vdwg.mxu0
        %v2004 = vadd.f32 %v1126, %v2001
        %v2005 = vld [vmem:[#allocation27] sm:$0x1]
        %v2006 = vld [vmem:[#allocation28] sm:$0x1]
        %2007 = vadd.xlane.f32.xlu0 %v2004
        %v2008 = vpop.xlane.xlu0 %2007
        %v2009 = vrcp.pop 128.0
        %v2010 = vmul.f32 %v2008, %v2009
        %v2011 = vsub.f32 %v2004, %v2010
        %v2012 = vmul.f32 %v2011, %v2011
        %2013 = vadd.xlane.f32.xlu0 %v2012
        %v2014 = vpop.xlane.xlu0 %2013
        %v2015 = vmul.f32 %v2014, %v2009
        %v2016 = vadd.f32 %v2015, 1e-05
        %v2017 = vrsqrt.pop %v2016
        %v2018 = vmul.f32 %v2011, %v2017
        %v2020 = vlaneseq
        %v2021 = vshrl.u32 %v2020, 7
        %v2022 = vsub.s32 0, %v2021
        %v2023 = vrot.slane %v2005, %v2022
        %v2025 = vmul.f32 %v2018, %v2023
        %v2027 = vlaneseq
        %v2028 = vshrl.u32 %v2027, 7
        %v2029 = vsub.s32 0, %v2028
        %v2030 = vrot.slane %v2006, %v2029
        %v2032 = vadd.f32 %v2025, %v2030
        %v2033 = vld [vmem:[#allocation21] sm:$0xff]
        %v2034 = vld [vmem:[#allocation21 + $0x8] sm:$0xff]
        %v2035 = vld [vmem:[#allocation21 + $0x10] sm:$0xff]
        %v2036 = vld [vmem:[#allocation21 + $0x18] sm:$0xff]
        %v2037 = vld [vmem:[#allocation21 + $0x20] sm:$0xff]
        %v2038 = vld [vmem:[#allocation21 + $0x28] sm:$0xff]
        %v2039 = vld [vmem:[#allocation21 + $0x30] sm:$0xff]
        %v2040 = vld [vmem:[#allocation21 + $0x38] sm:$0xff]
        %v2041 = vld [vmem:[#allocation21 + $0x40] sm:$0xff]
        %v2042 = vld [vmem:[#allocation21 + $0x48] sm:$0xff]
        %v2043 = vld [vmem:[#allocation21 + $0x50] sm:$0xff]
        %v2044 = vld [vmem:[#allocation21 + $0x58] sm:$0xff]
        %v2045 = vld [vmem:[#allocation21 + $0x60] sm:$0xff]
        %v2046 = vld [vmem:[#allocation21 + $0x68] sm:$0xff]
        %v2047 = vld [vmem:[#allocation21 + $0x70] sm:$0xff]
        %v2048 = vld [vmem:[#allocation21 + $0x78] sm:$0xff]
        %v2049 = vld [vmem:[#allocation21 + $0x80] sm:$0xff]
        %v2050 = vld [vmem:[#allocation21 + $0x88] sm:$0xff]
        %v2051 = vld [vmem:[#allocation21 + $0x90] sm:$0xff]
        %v2052 = vld [vmem:[#allocation21 + $0x98] sm:$0xff]
        %v2053 = vld [vmem:[#allocation21 + $0xa0] sm:$0xff]
        %v2054 = vld [vmem:[#allocation21 + $0xa8] sm:$0xff]
        %v2055 = vld [vmem:[#allocation21 + $0xb0] sm:$0xff]
        %v2056 = vld [vmem:[#allocation21 + $0xb8] sm:$0xff]
        %v2057 = vld [vmem:[#allocation21 + $0xc0] sm:$0xff]
        %v2058 = vld [vmem:[#allocation21 + $0xc8] sm:$0xff]
        %v2059 = vld [vmem:[#allocation21 + $0xd0] sm:$0xff]
        %v2060 = vld [vmem:[#allocation21 + $0xd8] sm:$0xff]
        %v2061 = vld [vmem:[#allocation21 + $0xe0] sm:$0xff]
        %v2062 = vld [vmem:[#allocation21 + $0xe8] sm:$0xff]
        %v2063 = vld [vmem:[#allocation21 + $0xf0] sm:$0xff]
        %v2064 = vld [vmem:[#allocation21 + $0xf8] sm:$0xff]
        %v2065 = vld [vmem:[#allocation22] sm:$0x3]
        %v2067 = vlaneseq
        %v2068 = vshrl.u32 %v2067, 7
        %v2069 = vsub.s32 0, %v2068
        %v2070 = vrot.slane %v2065, %v2069
        %v2071 = vlaneseq
        %v2072 = vshrl.u32 %v2071, 7
        %v2073 = vsub.s32 1, %v2072
        %v2074 = vrot.slane %v2065, %v2073
        %2077 = vmatprep.subr.mxu0 %v2034
        %2078 = vmatpush1.msra.mxu0 %v2033
        %2079 = vmatprep.subr.mxu0 %v2036
        %2080 = vmatpush1.msra.mxu0 %v2035
        %2081 = vmatprep.subr.mxu0 %v2038
        %2082 = vmatpush1.msra.mxu0 %v2037
        %2083 = vmatprep.subr.mxu0 %v2040
        %2084 = vmatpush1.msra.mxu0 %v2039
        %2085 = vmatprep.subr.mxu0 %v2042
        %2086 = vmatpush1.msra.mxu0 %v2041
        %2087 = vmatprep.subr.mxu0 %v2044
        %2088 = vmatpush1.msra.mxu0 %v2043
        %2089 = vmatprep.subr.mxu0 %v2046
        %2090 = vmatpush1.msra.mxu0 %v2045
        %2091 = vmatprep.subr.mxu0 %v2048
        %2092 = vmatpush1.msra.mxu0 %v2047
        %2093 = vmatprep.subr.mxu0 %v2050
        %2094 = vmatpush1.msra.mxu0 %v2049
        %2095 = vmatprep.subr.mxu0 %v2052
        %2096 = vmatpush1.msra.mxu0 %v2051
        %2097 = vmatprep.subr.mxu0 %v2054
        %2098 = vmatpush1.msra.mxu0 %v2053
        %2099 = vmatprep.subr.mxu0 %v2056
        %2100 = vmatpush1.msra.mxu0 %v2055
        %2101 = vmatprep.subr.mxu0 %v2058
        %2102 = vmatpush1.msra.mxu0 %v2057
        %2103 = vmatprep.subr.mxu0 %v2060
        %2104 = vmatpush1.msra.mxu0 %v2059
        %2105 = vmatprep.subr.mxu0 %v2062
        %2106 = vmatpush1.msra.mxu0 %v2061
        %2107 = vmatprep.subr.mxu0 %v2064
        %2108 = vmatpush1.msra.mxu0 %v2063
        %2109 = vmatprep.subr.mxu0 0.0
        %2110 = vmatpush1.msra.mxu0 0.0
        %2111 = vmatprep.subr.mxu0 0.0
        %2112 = vmatpush1.msra.mxu0 0.0
        %2113 = vmatprep.subr.mxu0 0.0
        %2114 = vmatpush1.msra.mxu0 0.0
        %2115 = vmatprep.subr.mxu0 0.0
        %2116 = vmatpush1.msra.mxu0 0.0
        %2117 = vmatprep.subr.mxu0 0.0
        %2118 = vmatpush1.msra.mxu0 0.0
        %2119 = vmatprep.subr.mxu0 0.0
        %2120 = vmatpush1.msra.mxu0 0.0
        %2121 = vmatprep.subr.mxu0 0.0
        %2122 = vmatpush1.msra.mxu0 0.0
        %2123 = vmatprep.subr.mxu0 0.0
        %2124 = vmatpush1.msra.mxu0 0.0
        %2125 = vmatprep.subr.mxu0 0.0
        %2126 = vmatpush1.msra.mxu0 0.0
        %2127 = vmatprep.subr.mxu0 0.0
        %2128 = vmatpush1.msra.mxu0 0.0
        %2129 = vmatprep.subr.mxu0 0.0
        %2130 = vmatpush1.msra.mxu0 0.0
        %2131 = vmatprep.subr.mxu0 0.0
        %2132 = vmatpush1.msra.mxu0 0.0
        %2133 = vmatprep.subr.mxu0 0.0
        %2134 = vmatpush1.msra.mxu0 0.0
        %2135 = vmatprep.subr.mxu0 0.0
        %2136 = vmatpush1.msra.mxu0 0.0
        %2137 = vmatprep.subr.mxu0 0.0
        %2138 = vmatpush1.msra.mxu0 0.0
        %2139 = vmatprep.subr.mxu0 0.0
        %2140 = vmatpush1.msra.mxu0 0.0
        %2141 = vmatprep.mubr.f32.mxu0 0.0
        %2142 = vmatmul.mubr.f32.gmra.mrb[0].mxu0 %v2032
        %v2143 = vpop.f32.mrb[0].mxu0
        %v2144 = vadd.f32 %v2070, %v2143
        %v2145 = vpop.f32.mrb[0].mxu0
        %v2146 = vadd.f32 %v2074, %v2145
        %2147 = vdwg.mxu0
        %v2148 = vmax.f32 %v2144, 0.0
        %v2149 = vmax.f32 %v2146, 0.0
        %v2150 = vld [vmem:[#allocation24] sm:$0xff]
        %v2151 = vld [vmem:[#allocation24 + $0x8] sm:$0xff]
        %v2152 = vld [vmem:[#allocation24 + $0x10] sm:$0xff]
        %v2153 = vld [vmem:[#allocation24 + $0x18] sm:$0xff]
        %v2154 = vld [vmem:[#allocation24 + $0x20] sm:$0xff]
        %v2155 = vld [vmem:[#allocation24 + $0x28] sm:$0xff]
        %v2156 = vld [vmem:[#allocation24 + $0x30] sm:$0xff]
        %v2157 = vld [vmem:[#allocation24 + $0x38] sm:$0xff]
        %v2158 = vld [vmem:[#allocation24 + $0x40] sm:$0xff]
        %v2159 = vld [vmem:[#allocation24 + $0x48] sm:$0xff]
        %v2160 = vld [vmem:[#allocation24 + $0x50] sm:$0xff]
        %v2161 = vld [vmem:[#allocation24 + $0x58] sm:$0xff]
        %v2162 = vld [vmem:[#allocation24 + $0x60] sm:$0xff]
        %v2163 = vld [vmem:[#allocation24 + $0x68] sm:$0xff]
        %v2164 = vld [vmem:[#allocation24 + $0x70] sm:$0xff]
        %v2165 = vld [vmem:[#allocation24 + $0x78] sm:$0xff]
        %v2166 = vld [vmem:[#allocation24 + $0x80] sm:$0xff]
        %v2167 = vld [vmem:[#allocation24 + $0x88] sm:$0xff]
        %v2168 = vld [vmem:[#allocation24 + $0x90] sm:$0xff]
        %v2169 = vld [vmem:[#allocation24 + $0x98] sm:$0xff]
        %v2170 = vld [vmem:[#allocation24 + $0xa0] sm:$0xff]
        %v2171 = vld [vmem:[#allocation24 + $0xa8] sm:$0xff]
        %v2172 = vld [vmem:[#allocation24 + $0xb0] sm:$0xff]
        %v2173 = vld [vmem:[#allocation24 + $0xb8] sm:$0xff]
        %v2174 = vld [vmem:[#allocation24 + $0xc0] sm:$0xff]
        %v2175 = vld [vmem:[#allocation24 + $0xc8] sm:$0xff]
        %v2176 = vld [vmem:[#allocation24 + $0xd0] sm:$0xff]
        %v2177 = vld [vmem:[#allocation24 + $0xd8] sm:$0xff]
        %v2178 = vld [vmem:[#allocation24 + $0xe0] sm:$0xff]
        %v2179 = vld [vmem:[#allocation24 + $0xe8] sm:$0xff]
        %v2180 = vld [vmem:[#allocation24 + $0xf0] sm:$0xff]
        %v2181 = vld [vmem:[#allocation24 + $0xf8] sm:$0xff]
        %v2182 = vld [vmem:[#allocation25] sm:$0x1]
        %v2184 = vlaneseq
        %v2185 = vshrl.u32 %v2184, 7
        %v2186 = vsub.s32 0, %v2185
        %v2187 = vrot.slane %v2182, %v2186
        %2189 = vmatprep.subr.mxu0 0.0
        %2190 = vmatpush1.msra.mxu0 %v2150
        %2191 = vmatprep.subr.mxu0 0.0
        %2192 = vmatpush1.msra.mxu0 %v2151
        %2193 = vmatprep.subr.mxu0 0.0
        %2194 = vmatpush1.msra.mxu0 %v2152
        %2195 = vmatprep.subr.mxu0 0.0
        %2196 = vmatpush1.msra.mxu0 %v2153
        %2197 = vmatprep.subr.mxu0 0.0
        %2198 = vmatpush1.msra.mxu0 %v2154
        %2199 = vmatprep.subr.mxu0 0.0
        %2200 = vmatpush1.msra.mxu0 %v2155
        %2201 = vmatprep.subr.mxu0 0.0
        %2202 = vmatpush1.msra.mxu0 %v2156
        %2203 = vmatprep.subr.mxu0 0.0
        %2204 = vmatpush1.msra.mxu0 %v2157
        %2205 = vmatprep.subr.mxu0 0.0
        %2206 = vmatpush1.msra.mxu0 %v2158
        %2207 = vmatprep.subr.mxu0 0.0
        %2208 = vmatpush1.msra.mxu0 %v2159
        %2209 = vmatprep.subr.mxu0 0.0
        %2210 = vmatpush1.msra.mxu0 %v2160
        %2211 = vmatprep.subr.mxu0 0.0
        %2212 = vmatpush1.msra.mxu0 %v2161
        %2213 = vmatprep.subr.mxu0 0.0
        %2214 = vmatpush1.msra.mxu0 %v2162
        %2215 = vmatprep.subr.mxu0 0.0
        %2216 = vmatpush1.msra.mxu0 %v2163
        %2217 = vmatprep.subr.mxu0 0.0
        %2218 = vmatpush1.msra.mxu0 %v2164
        %2219 = vmatprep.subr.mxu0 0.0
        %2220 = vmatpush1.msra.mxu0 %v2165
        %2221 = vmatprep.subr.mxu0 0.0
        %2222 = vmatpush1.msra.mxu0 %v2166
        %2223 = vmatprep.subr.mxu0 0.0
        %2224 = vmatpush1.msra.mxu0 %v2167
        %2225 = vmatprep.subr.mxu0 0.0
        %2226 = vmatpush1.msra.mxu0 %v2168
        %2227 = vmatprep.subr.mxu0 0.0
        %2228 = vmatpush1.msra.mxu0 %v2169
        %2229 = vmatprep.subr.mxu0 0.0
        %2230 = vmatpush1.msra.mxu0 %v2170
        %2231 = vmatprep.subr.mxu0 0.0
        %2232 = vmatpush1.msra.mxu0 %v2171
        %2233 = vmatprep.subr.mxu0 0.0
        %2234 = vmatpush1.msra.mxu0 %v2172
        %2235 = vmatprep.subr.mxu0 0.0
        %2236 = vmatpush1.msra.mxu0 %v2173
        %2237 = vmatprep.subr.mxu0 0.0
        %2238 = vmatpush1.msra.mxu0 %v2174
        %2239 = vmatprep.subr.mxu0 0.0
        %2240 = vmatpush1.msra.mxu0 %v2175
        %2241 = vmatprep.subr.mxu0 0.0
        %2242 = vmatpush1.msra.mxu0 %v2176
        %2243 = vmatprep.subr.mxu0 0.0
        %2244 = vmatpush1.msra.mxu0 %v2177
        %2245 = vmatprep.subr.mxu0 0.0
        %2246 = vmatpush1.msra.mxu0 %v2178
        %2247 = vmatprep.subr.mxu0 0.0
        %2248 = vmatpush1.msra.mxu0 %v2179
        %2249 = vmatprep.subr.mxu0 0.0
        %2250 = vmatpush1.msra.mxu0 %v2180
        %2251 = vmatprep.subr.mxu0 0.0
        %2252 = vmatpush1.msra.mxu0 %v2181
        %2253 = vmatprep.mubr.f32.mxu0 %v2149
        %2254 = vmatmul.mubr.f32.gmra.mrb[0].mxu0 %v2148
        %v2255 = vpop.f32.mrb[0].mxu0
        %v2256 = vadd.f32 %v2187, %v2255
        %v2257 = vpop.f32.mrb[0].mxu0
        %2258 = vdwg.mxu0
        %v2259 = vadd.f32 %v2032, %v2256
        %v2260 = vld [vmem:[#allocation30] sm:$0x1]
        %v2261 = vld [vmem:[#allocation31] sm:$0x1]
        %2262 = vadd.xlane.f32.xlu0 %v2259
        %v2263 = vpop.xlane.xlu0 %2262
        %v2264 = vmul.f32 %v2263, %v2009
        %v2265 = vsub.f32 %v2259, %v2264
        %v2266 = vmul.f32 %v2265, %v2265
        %2267 = vadd.xlane.f32.xlu0 %v2266
        %v2268 = vpop.xlane.xlu0 %2267
        %v2269 = vmul.f32 %v2268, %v2009
        %v2270 = vadd.f32 %v2269, 1e-05
        %v2271 = vrsqrt.pop %v2270
        %v2272 = vmul.f32 %v2265, %v2271
        %v2274 = vlaneseq
        %v2275 = vshrl.u32 %v2274, 7
        %v2276 = vsub.s32 0, %v2275
        %v2277 = vrot.slane %v2260, %v2276
        %v2279 = vmul.f32 %v2272, %v2277
        %v2281 = vlaneseq
        %v2282 = vshrl.u32 %v2281, 7
        %v2283 = vsub.s32 0, %v2282
        %v2284 = vrot.slane %v2261, %v2283
        %v2286 = vadd.f32 %v2279, %v2284
        %2287 = vst [vmem:[%s860] sm:$0xff] %v2286
        %s2288 = sand.u32 %s458, 1
        %s2289 = scalar_lea.sflag [#allocation6], %s2288
        %s2290 = sand.u32 %s458, 1
        %s2291 = smul.addr %s2290, 8
        %s2292 = scalar_lea.vmem [#allocation33], %s2291
        // Predicated region
        $region169: #{tpu_custom_call.1} parent=91 // pred_check
          %p2293 = pneg %p468
        $region170: #{tpu_custom_call.1} parent=91 // pred_check_branch
          %2295 = sbr.rel (%p2293) target = $region172
        $region171: #{tpu_custom_call.1} parent=91 // pred_region
          %s2297 = ssub.s32 128, 128
          %2298 = vsyncadd %s2289, %s2297
          %s2299 = smul.addr %s50, 2
          %s2300 = sadd.s32 %s51, %s2299
          %s2301 = smul.addr %s2300, 128
          %s2302 = scalar_lea.hbm %s18, %s2301
          %s2304 = sshll.u32 %s2292, 4
          %s2305 = int_to_ptr.vmem [resolvable:$true] %s2304
          %2307 = dma.vmem_to_hbm [thread:$0]  %s2305, 128, %s2302, %s2289
        $region172: #{tpu_custom_call.1} parent=91 // pred_fallthru
          _
      $region92: #{tpu_custom_call.1} parent=5 // pred_fallthru
        _
      %p2308 = scmp.le.s32.totalorder 2, %s41
      // Predicated region
      $region173: #{tpu_custom_call.1} parent=5 // pred_check
        %p2309 = pneg %p2308
      $region174: #{tpu_custom_call.1} parent=5 // pred_check_branch
        %2311 = sbr.rel (%p2309) target = $region176
      $region175: #{tpu_custom_call.1} parent=5 // pred_region
        %s2312 = ssub.s32 %s41, 2
        // Predicated region
        $region177: #{tpu_custom_call.1} parent=175 // pred_check
          %p2313 = pneg %p474
        $region178: #{tpu_custom_call.1} parent=175 // pred_check_branch
          %2315 = sbr.rel (%p2313) target = $region180
        $region179: #{tpu_custom_call.1} parent=175 // pred_region
          %s2316 = sand.u32 %s459, 1
          %s2317 = scalar_lea.sflag [#allocation6], %s2316
          %s2318 = sand.u32 %s459, 1
          %s2319 = smul.addr %s2318, 8
          %s2320 = scalar_lea.vmem [#allocation33], %s2319
          %2321 = dma.done %s2317, 128
        $region180: #{tpu_custom_call.1} parent=175 // pred_fallthru
          _
      $region176: #{tpu_custom_call.1} parent=5 // pred_fallthru
        _
    $region6: #{tpu_custom_call.1} parent=1 // loop_footer
      %s45 = sadd.s32 1, %s41
    $region7: #{tpu_custom_call.1} parent=1 // loop_footer_branch
      %40 = sbr.rel target = $region3
    $region8: #{tpu_custom_call.1} parent=1 // loop_exit
      _
    %2322 = vsyncpa [#allocation5], 1
    %s2323 = scalar_lea.sflag [#allocation5], 1
    %2324 = vsyncpa %s2323, 1
    %2325 = vsyncpa [#allocation8], 1
    %s2326 = scalar_lea.sflag [#allocation8], 1
    %2327 = vsyncpa %s2326, 1
    %2328 = vsyncpa [#allocation11], 1
    %2329 = vsyncpa [#allocation14], 1
    %2330 = vsyncpa [#allocation17], 1
    %2331 = vsyncpa [#allocation20], 1
    %2332 = vsyncpa [#allocation23], 1
    %2333 = vsyncpa [#allocation26], 1
    %2334 = vsyncpa [#allocation29], 1
    %2335 = vsyncpa [#allocation32], 1
    %2336 = vsyncpa [#allocation6], 1
    %s2337 = scalar_lea.sflag [#allocation6], 1
    %2338 = vsyncpa %s2337, 1

</llo_original>
